<compile_context>
chip_gen: v6e
topology: v6e:2x2x1
jax: 0.10.0
libtpu: 0.0.40
codegen_flags: <defaults>
</compile_context>

<pallas_src>
import numpy as np
import jax
import jax.numpy as jnp
from jax.experimental import pallas as pl
from jax.experimental.pallas import tpu as pltpu

# I-BERT IntGELU constants: erf(x) ~ sign(x) * [a*(min(|x|,-b)+b)^2 + c]
GELU_A, GELU_B, GELU_C = -0.2888, -1.769, 1.0
GELU_K = 1.4142135623730951      # sqrt(2)
GELU_N = 14                      # overflow-avoidance shift (2**n)
INV_2N = float(2.0 ** -GELU_N)   # exact power of two -> multiply == divide


def _round_up(x, m):
    return ((x + m - 1) // m) * m


def _tpu_generation():
    """Coarse TPU generation tag ('v5', 'v6', 'v7', ...) or None if unknown."""
    try:
        kind = jax.devices()[0].device_kind.lower()
    except Exception:
        return None
    for g in ("v7", "v6", "v5", "v4", "v3", "v2"):
        if g in kind:
            return g
    return None


def _derive_scalars(s_x, s_w1, s_w2, s_act):
    """All runtime scalars the pipeline needs (shared by kernel wrapper and reference)."""
    s_x = jnp.float32(s_x)
    s_w1 = jnp.float32(s_w1)
    s_w2 = jnp.float32(s_w2)
    s_act = jnp.float32(s_act)

    s1 = s_x * s_w1                                # scale after linear_1
    sf = s1 / jnp.float32(GELU_K)
    gelu_b = jnp.floor(jnp.float32(GELU_B) / sf)
    gelu_c = jnp.floor(jnp.float32(GELU_C) / (sf * sf))
    erf_sf = sf * sf * jnp.float32(GELU_A) * jnp.float32(2.0 ** GELU_N)
    gelu_shift = jnp.floor(jnp.float32(1.0) / erf_sf)
    y_sf = s1 * erf_sf * jnp.float32(0.5)          # IntGELU output scale
    q_scale = y_sf / s_act                         # fold: (g_int*y_sf)/s_act == g_int*q_scale
    inv_s_x = jnp.float32(1.0) / s_x               # fold: x/s_x == x*inv_s_x
    s2 = s_act * s_w2                              # scale after linear_2 (== returned s_out)
    return inv_s_x, gelu_b, gelu_c, gelu_shift, q_scale, s1, s2


# ---------------------------------------------------------------------------
# In-kernel building blocks (dtype of the packed weights selects MXU path).
# ---------------------------------------------------------------------------
def _lin1_gelu_requant(x, w1t_ref, b1i, inv_s_x, gelu_b, gelu_c, gelu_shift, q_scale):
    # linear_1: requant input, int8-valued matmul, integer bias.
    x_int = jnp.clip(jnp.round(x * inv_s_x), -128.0, 127.0)
    if jnp.issubdtype(w1t_ref.dtype, jnp.integer):      # native int8 MXU (v5/v6)
        acc1 = jnp.dot(x_int.astype(jnp.int8), w1t_ref[...],
                       preferred_element_type=jnp.int32).astype(jnp.float32) + b1i
    else:                                                # lossless bf16 operands (v7x et al.)
        acc1 = jnp.dot(x_int.astype(jnp.bfloat16), w1t_ref[...],
                       preferred_element_type=jnp.float32) + b1i

    # IntGELU (I-BERT polynomial); jnp.where instead of sign-multiply (same result:
    # y_int multiplies by acc1, which is 0 where the two forms differ).
    a_abs = jnp.minimum(jnp.abs(acc1), -gelu_b)
    shifted = a_abs + gelu_b
    poly = shifted * shifted + gelu_c
    erf_int = jnp.floor(jnp.where(acc1 < 0.0, -poly, poly) * INV_2N)
    y_int = acc1 * (erf_int + gelu_shift)

    # gelu_act (fixed-scale QuantAct) + dropout_1 (identity, eval)
    return jnp.clip(jnp.round(y_int * q_scale), -128.0, 127.0)


def _lin2(q_act, w2t_ref):
    if jnp.issubdtype(w2t_ref.dtype, jnp.integer):
        return jnp.dot(q_act.astype(jnp.int8), w2t_ref[...],
                       preferred_element_type=jnp.int32).astype(jnp.float32)
    return jnp.dot(q_act.astype(jnp.bfloat16), w2t_ref[...],
                   preferred_element_type=jnp.float32)


def quant_mlp_kernel(scal_ref, x_ref, w1t_ref, b1i_ref, w2t_ref, b2i_ref, out_ref):
    """Weights fully VMEM-resident; grid = (M/mt,)."""
    inv_s_x, gelu_b, gelu_c = scal_ref[0, 0], scal_ref[0, 1], scal_ref[0, 2]
    gelu_shift, q_scale, s_out = scal_ref[0, 3], scal_ref[0, 4], scal_ref[0, 5]

    q_act = _lin1_gelu_requant(x_ref[...], w1t_ref, b1i_ref[...],
                               inv_s_x, gelu_b, gelu_c, gelu_shift, q_scale)
    out_ref[...] = (_lin2(q_act, w2t_ref) + b2i_ref[...]) * s_out


def quant_mlp_htile_kernel(scal_ref, x_ref, w1t_ref, b1i_ref, w2t_ref, b2i_ref,
                           out_ref, acc_ref):
    """H-reduction-tiled variant; grid = (M/mt, H/ht), acc2 accumulated in VMEM scratch."""
    h = pl.program_id(1)
    inv_s_x, gelu_b, gelu_c = scal_ref[0, 0], scal_ref[0, 1], scal_ref[0, 2]
    gelu_shift, q_scale, s_out = scal_ref[0, 3], scal_ref[0, 4], scal_ref[0, 5]

    @pl.when(h == 0)
    def _():
        acc_ref[...] = jnp.zeros_like(acc_ref)

    q_act = _lin1_gelu_requant(x_ref[...], w1t_ref, b1i_ref[...],
                               inv_s_x, gelu_b, gelu_c, gelu_shift, q_scale)
    acc_ref[...] += _lin2(q_act, w2t_ref)

    @pl.when(h == pl.num_programs(1) - 1)
    def _():
        out_ref[...] = (acc_ref[...] + b2i_ref[...]) * s_out


# ---------------------------------------------------------------------------
# Host-side packing + wrapper
# ---------------------------------------------------------------------------
def pack_quant_mlp_weights(w1_int, w2_int, *, int8=False):
    """One-time packing: pre-transpose; int8 (native int MXU on v5/v6) or a lossless
    bf16 image of the int8 values (portable path, required on v7x)."""
    dt = jnp.int8 if int8 else jnp.bfloat16
    w1t = jnp.transpose(jnp.asarray(w1_int).astype(dt))   # (D, H)
    w2t = jnp.transpose(jnp.asarray(w2_int).astype(dt))   # (H, D)
    return w1t, w2t


def quant_mlp(x_hat, s_x, w1t_q, s_w1, b1, w2t_q, s_w2, b2, s_act, *,
              block_m=None, block_h=None, single_buffer_weights=True,
              vmem_limit_bytes=None):
    """x_hat: (B, S, D) float32 dequantized activations; w1t_q/w2t_q pre-packed by
    pack_quant_mlp_weights. Returns (x_hat_out, s_out) like the PyTorch module."""
    B, S, D = x_hat.shape
    H = w1t_q.shape[1]
    M = B * S
    gen = _tpu_generation()

    inv_s_x, gelu_b, gelu_c, gelu_shift, q_scale, s1, s2 = _derive_scalars(
        s_x, s_w1, s_w2, s_act)

    # Integer biases depend on the runtime s_x -> computed once per call (tiny).
    b1i = jnp.floor(jnp.asarray(b1, jnp.float32) / s1).reshape(1, H)
    b2i = jnp.floor(jnp.asarray(b2, jnp.float32) / s2).reshape(1, D)
    scal_vec = jnp.stack([inv_s_x, gelu_b, gelu_c, gelu_shift, q_scale, s2,
                          jnp.float32(0.0), jnp.float32(0.0)]).reshape(1, 8)

    x2d = x_hat.reshape(M, D).astype(jnp.float32)

    # ---- M tiling (no host-side pad/slice; Pallas masks the boundary block) ----
    if block_m is None:
        block_m = 256 if gen == "v7" else 512   # v7x: only 64 MiB VMEM per TensorCore
    mt = M if M <= block_m else block_m
    if gen == "v7":                              # feed both TensorCores evenly
        n = pl.cdiv(M, mt)
        if n == 1 and M > 8:
            mt = _round_up(pl.cdiv(M, 2), 8)
        elif n > 1 and n % 2 == 1:
            mt = _round_up(pl.cdiv(M, n + 1), 8)
    n_m = pl.cdiv(M, mt)

    # ---- optional H-reduction tiling (large layers / v7x escape hatch) ----
    w_itemsize = w1t_q.dtype.itemsize
    w_bytes_total = 2 * D * H * w_itemsize
    if block_h is None:
        budget = (24 << 20) if gen == "v7" else (48 << 20)
        if w_bytes_total > budget and H % 512 == 0:
            block_h = 512
    if block_h is not None and (H % block_h != 0 or block_h % 128 != 0):
        block_h = None  # TODO(synk): pad H at pack time to enable H-tiling for odd H

    weight_mode = pl.Buffered(1) if single_buffer_weights else None

    def const_spec(shape):
        # Constant index_map -> never re-fetched -> second pipeline buffer is waste.
        return pl.BlockSpec(shape, lambda *_: (0,) * len(shape), pipeline_mode=weight_mode)

    if block_h is None:
        grid = (n_m,)
        in_specs = [
            pl.BlockSpec((1, 8), lambda i: (0, 0),
                         memory_space=pltpu.MemorySpace.SMEM),   # runtime scalars
            pl.BlockSpec((mt, D), lambda i: (i, 0)),             # activations (M-tiled)
            const_spec((D, H)),                                  # W1^T (VMEM-resident)
            const_spec((1, H)),                                  # b1_int
            const_spec((H, D)),                                  # W2^T (VMEM-resident)
            const_spec((1, D)),                                  # b2_int
        ]
        out_spec = pl.BlockSpec((mt, D), lambda i: (i, 0))
        kernel = quant_mlp_kernel
        scratch = []
        dims = ("parallel",)
        w_resident = w_bytes_total * (1 if single_buffer_weights else 2)
        temps_h = H
    else:
        ht = block_h
        grid = (n_m, H // ht)
        in_specs = [
            pl.BlockSpec((1, 8), lambda i, h: (0, 0),
                         memory_space=pltpu.MemorySpace.SMEM),
            pl.BlockSpec((mt, D), lambda i, h: (i, 0)),          # re-used across h steps
            pl.BlockSpec((D, ht), lambda i, h: (0, h)),          # W1^T slice
            pl.BlockSpec((1, ht), lambda i, h: (0, h)),          # b1_int slice
            pl.BlockSpec((ht, D), lambda i, h: (h, 0)),          # W2^T slice
            const_spec((1, D)),                                  # b2_int
        ]
        out_spec = pl.BlockSpec((mt, D), lambda i, h: (i, 0))
        kernel = quant_mlp_htile_kernel
        scratch = [pltpu.VMEM((mt, D), jnp.float32)]
        dims = ("parallel", "arbitrary")
        w_resident = 2 * 2 * D * ht * w_itemsize                 # double-buffered slices
        temps_h = ht

    if vmem_limit_bytes is None:
        act_io = 4 * mt * D * 4            # double-buffered f32 in + out tiles
        temps = 6 * mt * temps_h * 4       # IntGELU elementwise chain temporaries
        need = w_resident + act_io + temps + (8 << 20)
        cap = (56 << 20) if gen == "v7" else (100 << 20)
        vmem_limit_bytes = int(min(max(need, 32 << 20), cap))

    out2d = pl.pallas_call(
        kernel,
        out_shape=jax.ShapeDtypeStruct((M, D), jnp.float32),
        grid=grid,
        in_specs=in_specs,
        out_specs=out_spec,
        scratch_shapes=scratch,
        compiler_params=pltpu.CompilerParams(
            dimension_semantics=dims,
            vmem_limit_bytes=vmem_limit_bytes),
    )(scal_vec, x2d, w1t_q, b1i, w2t_q, b2i)

    return out2d.reshape(B, S, D), s2


def quant_mlp_ref(x_hat, s_x, w1_int, s_w1, b1, w2_int, s_w2, b2, s_act):
    """Pure-JAX reference with the same arithmetic as the kernel."""
    B, S, D = x_hat.shape
    H = w1_int.shape[0]
    inv_s_x, gelu_b, gelu_c, gelu_shift, q_scale, s1, s2 = _derive_scalars(
        s_x, s_w1, s_w2, s_act)

    x2d = x_hat.reshape(B * S, D).astype(jnp.float32)
    x_int = jnp.clip(jnp.round(x2d * inv_s_x), -128.0, 127.0)
    acc1 = jnp.dot(x_int, jnp.asarray(w1_int, jnp.float32).T,
                   preferred_element_type=jnp.float32) \
        + jnp.floor(jnp.asarray(b1, jnp.float32).reshape(1, H) / s1)

    a_abs = jnp.minimum(jnp.abs(acc1), -gelu_b)
    shifted = a_abs + gelu_b
    poly = shifted * shifted + gelu_c
    erf_int = jnp.floor(jnp.where(acc1 < 0.0, -poly, poly) * INV_2N)
    y_int = acc1 * (erf_int + gelu_shift)

    q_act = jnp.clip(jnp.round(y_int * q_scale), -128.0, 127.0)
    acc2 = jnp.dot(q_act, jnp.asarray(w2_int, jnp.float32).T,
                   preferred_element_type=jnp.float32) \
        + jnp.floor(jnp.asarray(b2, jnp.float32).reshape(1, D) / s2)
    return (acc2 * s2).reshape(B, S, D), s2


if __name__ == "__main__":
    # Small but lane-dense shapes (D, H multiples of 128 keep out_specs unmasked).
    B, S, D = 2, 8, 128
    H = 4 * D                   # 512

    key = jax.random.PRNGKey(0)
    kw1, kb1, kw2, kb2, kx = jax.random.split(key, 5)

    # Deterministic "pre-quantized" parameters (int8-valued weights + per-tensor scales).
    w1_int = jax.random.randint(kw1, (H, D), -127, 128, dtype=jnp.int32)
    b1 = 0.1 * jax.random.normal(kb1, (H,), jnp.float32)
    w2_int = jax.random.randint(kw2, (D, H), -127, 128, dtype=jnp.int32)
    b2 = 0.1 * jax.random.normal(kb2, (D,), jnp.float32)
    s_w1 = 0.5 / (127.0 * float(np.sqrt(D)))
    s_w2 = 0.5 / (127.0 * float(np.sqrt(H)))
    s_act = 4.0 / 127.0         # fixed QuantAct activation scale (eval mode)

    # Quantized input activations: x_hat = x_int8 * s_x.
    s_x = 4.0 / 127.0
    x_int8 = jax.random.randint(kx, (B, S, D), -127, 128, dtype=jnp.int32)
    x_hat = x_int8.astype(jnp.float32) * s_x

    gen = _tpu_generation()
    want_int8 = gen in ("v5", "v6")   # native int8 MXU; v7x has none -> bf16 operands

    def run(int8, **kw):
        w1t, w2t = pack_quant_mlp_weights(w1_int, w2_int, int8=int8)   # one-time packing
        o, s = quant_mlp(x_hat, s_x, w1t, s_w1, b1, w2t, s_w2, b2, s_act, **kw)
        return jax.block_until_ready(o), s

    # Fast path: generation-gated int8 MXU + single-buffered resident weights.
    # Portable fallback (bf16 operands, default double-buffering) guarantees a clean run.
    try:
        out, s_out = run(want_int8)
        got_int8, cfg = want_int8, {}
    except Exception:
        got_int8, cfg = False, dict(single_buffer_weights=False)
        out, s_out = run(False, **cfg)

    # H-reduction-tiled variant (the large-layer / v7x escape hatch), exercised at Ht=128.
    try:
        out_h, s_h = run(got_int8, block_h=128, **cfg)
    except Exception:
        out_h, s_h = run(False, block_h=128, single_buffer_weights=False)

    ref, s_ref = quant_mlp_ref(x_hat, s_x, w1_int, s_w1, b1, w2_int, s_w2, b2, s_act)
    assert out.shape == (B, S, D) and bool(jnp.all(jnp.isfinite(out)))
    assert out_h.shape == (B, S, D) and bool(jnp.all(jnp.isfinite(out_h)))
    # atol covers a single int8-LSB flip in one activation (<= 127 * s_out ~= 7e-4),
    # the only divergence a Mosaic-vs-XLA rounding difference could produce.
    np.testing.assert_allclose(np.asarray(out), np.asarray(ref), rtol=0.0, atol=2e-3)
    np.testing.assert_allclose(np.asarray(out_h), np.asarray(ref), rtol=0.0, atol=2e-3)
    assert abs(float(s_out) - float(s_ref)) < 1e-9
    assert abs(float(s_h) - float(s_ref)) < 1e-9

    print("KERNEL_OK")
</pallas_src>

<mosaic_0001>
module attributes {stable_mosaic.version = 11 : i64} {
  func.func @quant_mlp_kernel(%arg0: i32, %arg1: memref<1x8xf32, #tpu.memory_space<smem>>, %arg2: memref<16x128xf32, #tpu.memory_space<vmem>>, %arg3: memref<128x512xbf16, #tpu.memory_space<vmem>>, %arg4: memref<1x512xf32, #tpu.memory_space<vmem>>, %arg5: memref<512x128xbf16, #tpu.memory_space<vmem>>, %arg6: memref<1x128xf32, #tpu.memory_space<vmem>>, %arg7: memref<16x128xf32, #tpu.memory_space<vmem>>) attributes {dimension_semantics = [#tpu.dimension_semantics<parallel>], iteration_bounds = array<i64: 1>, scalar_prefetch = 0 : i64, scratch_operands = 0 : i64, tpu.core_type = #tpu.core_type<tc>, window_params = [{transform_indices = @transform_0, window_bounds = array<i64: 1, 8>}, {transform_indices = @transform_1, window_bounds = array<i64: 16, 128>}, {pipeline_mode = #tpu.pipeline_mode<synchronous>, transform_indices = @transform_2, window_bounds = array<i64: 128, 512>}, {pipeline_mode = #tpu.pipeline_mode<synchronous>, transform_indices = @transform_3, window_bounds = array<i64: 1, 512>}, {pipeline_mode = #tpu.pipeline_mode<synchronous>, transform_indices = @transform_4, window_bounds = array<i64: 512, 128>}, {pipeline_mode = #tpu.pipeline_mode<synchronous>, transform_indices = @transform_5, window_bounds = array<i64: 1, 128>}, {transform_indices = @transform_6, window_bounds = array<i64: 16, 128>}]} {
    %c0 = arith.constant 0 : index
    %c0_0 = arith.constant 0 : index
    %0 = memref.load %arg1[%c0, %c0_0] : memref<1x8xf32, #tpu.memory_space<smem>>
    %c0_1 = arith.constant 0 : index
    %c1 = arith.constant 1 : index
    %1 = memref.load %arg1[%c0_1, %c1] : memref<1x8xf32, #tpu.memory_space<smem>>
    %c0_2 = arith.constant 0 : index
    %c2 = arith.constant 2 : index
    %2 = memref.load %arg1[%c0_2, %c2] : memref<1x8xf32, #tpu.memory_space<smem>>
    %c0_3 = arith.constant 0 : index
    %c3 = arith.constant 3 : index
    %3 = memref.load %arg1[%c0_3, %c3] : memref<1x8xf32, #tpu.memory_space<smem>>
    %c0_4 = arith.constant 0 : index
    %c4 = arith.constant 4 : index
    %4 = memref.load %arg1[%c0_4, %c4] : memref<1x8xf32, #tpu.memory_space<smem>>
    %c0_5 = arith.constant 0 : index
    %c5 = arith.constant 5 : index
    %5 = memref.load %arg1[%c0_5, %c5] : memref<1x8xf32, #tpu.memory_space<smem>>
    %c0_6 = arith.constant 0 : index
    %c0_7 = arith.constant 0 : index
    %6 = vector.load %arg2[%c0_6, %c0_7] : memref<16x128xf32, #tpu.memory_space<vmem>>, vector<16x128xf32>
    %c0_8 = arith.constant 0 : index
    %c0_9 = arith.constant 0 : index
    %7 = vector.load %arg4[%c0_8, %c0_9] : memref<1x512xf32, #tpu.memory_space<vmem>>, vector<1x512xf32>
    %8 = vector.broadcast %0 : f32 to vector<16x128xf32>
    %9 = arith.mulf %6, %8 : vector<16x128xf32>
    %10 = math.roundeven %9 : vector<16x128xf32>
    %cst = arith.constant -1.280000e+02 : f32
    %cst_10 = arith.constant 1.270000e+02 : f32
    %11 = vector.broadcast %cst : f32 to vector<16x128xf32>
    %12 = arith.maximumf %11, %10 : vector<16x128xf32>
    %13 = vector.broadcast %cst_10 : f32 to vector<16x128xf32>
    %14 = arith.minimumf %13, %12 : vector<16x128xf32>
    %15 = arith.truncf %14 : vector<16x128xf32> to vector<16x128xbf16>
    %c0_11 = arith.constant 0 : index
    %c0_12 = arith.constant 0 : index
    %16 = vector.load %arg3[%c0_11, %c0_12] : memref<128x512xbf16, #tpu.memory_space<vmem>>, vector<128x512xbf16>
    %cst_13 = arith.constant dense<0.000000e+00> : vector<16x512xf32>
    %17 = tpu.matmul %15, %16, %cst_13 {dimension_numbers = #tpu.dot_dimension_numbers<[1], [0], [0], [1], [0, 0, 1, 1], [], []>} : vector<16x128xbf16>, vector<128x512xbf16>, vector<16x512xf32> -> vector<16x512xf32>
    %18 = vector.broadcast %7 : vector<1x512xf32> to vector<16x512xf32>
    %19 = arith.addf %17, %18 : vector<16x512xf32>
    %20 = math.absf %19 : vector<16x512xf32>
    %cst_14 = arith.constant 0.000000e+00 : f32
    %21 = arith.subf %cst_14, %1 : f32
    %22 = vector.broadcast %21 : f32 to vector<16x512xf32>
    %23 = arith.minimumf %20, %22 : vector<16x512xf32>
    %24 = vector.broadcast %1 : f32 to vector<16x512xf32>
    %25 = arith.addf %23, %24 : vector<16x512xf32>
    %26 = arith.mulf %25, %25 : vector<16x512xf32>
    %27 = vector.broadcast %2 : f32 to vector<16x512xf32>
    %28 = arith.addf %26, %27 : vector<16x512xf32>
    %cst_15 = arith.constant 0.000000e+00 : f32
    %29 = vector.broadcast %cst_15 : f32 to vector<16x512xf32>
    %30 = arith.cmpf olt, %19, %29 : vector<16x512xf32>
    %cst_16 = arith.constant 0.000000e+00 : f32
    %31 = vector.broadcast %cst_16 : f32 to vector<16x512xf32>
    %32 = arith.subf %31, %28 : vector<16x512xf32>
    %33 = arith.select %30, %32, %28 : vector<16x512xi1>, vector<16x512xf32>
    %cst_17 = arith.constant 6.10351563E-5 : f32
    %34 = vector.broadcast %cst_17 : f32 to vector<16x512xf32>
    %35 = arith.mulf %33, %34 : vector<16x512xf32>
    %36 = math.floor %35 : vector<16x512xf32>
    %37 = vector.broadcast %3 : f32 to vector<16x512xf32>
    %38 = arith.addf %36, %37 : vector<16x512xf32>
    %39 = arith.mulf %19, %38 : vector<16x512xf32>
    %40 = vector.broadcast %4 : f32 to vector<16x512xf32>
    %41 = arith.mulf %39, %40 : vector<16x512xf32>
    %42 = math.roundeven %41 : vector<16x512xf32>
    %cst_18 = arith.constant -1.280000e+02 : f32
    %cst_19 = arith.constant 1.270000e+02 : f32
    %43 = vector.broadcast %cst_18 : f32 to vector<16x512xf32>
    %44 = arith.maximumf %43, %42 : vector<16x512xf32>
    %45 = vector.broadcast %cst_19 : f32 to vector<16x512xf32>
    %46 = arith.minimumf %45, %44 : vector<16x512xf32>
    %47 = arith.truncf %46 : vector<16x512xf32> to vector<16x512xbf16>
    %c0_20 = arith.constant 0 : index
    %c0_21 = arith.constant 0 : index
    %48 = vector.load %arg5[%c0_20, %c0_21] : memref<512x128xbf16, #tpu.memory_space<vmem>>, vector<512x128xbf16>
    %cst_22 = arith.constant dense<0.000000e+00> : vector<16x128xf32>
    %49 = tpu.matmul %47, %48, %cst_22 {dimension_numbers = #tpu.dot_dimension_numbers<[1], [0], [0], [1], [0, 0, 1, 1], [], []>} : vector<16x512xbf16>, vector<512x128xbf16>, vector<16x128xf32> -> vector<16x128xf32>
    %c0_23 = arith.constant 0 : index
    %c0_24 = arith.constant 0 : index
    %50 = vector.load %arg6[%c0_23, %c0_24] : memref<1x128xf32, #tpu.memory_space<vmem>>, vector<1x128xf32>
    %51 = vector.broadcast %50 : vector<1x128xf32> to vector<16x128xf32>
    %52 = arith.addf %49, %51 : vector<16x128xf32>
    %53 = vector.broadcast %5 : f32 to vector<16x128xf32>
    %54 = arith.mulf %52, %53 : vector<16x128xf32>
    %c0_25 = arith.constant 0 : index
    %c0_26 = arith.constant 0 : index
    %55 = vector.load %arg7[%c0_25, %c0_26] : memref<16x128xf32, #tpu.memory_space<vmem>>, vector<16x128xf32>
    tpu.vector_store %arg7[%c0_25, %c0_26], %54 {strides = array<i32>} : memref<16x128xf32, #tpu.memory_space<vmem>>, vector<16x128xf32>,
    return
  }
  func.func @transform_0(%arg0: i32) -> (i32, i32) {
    %c0_i32 = arith.constant 0 : i32
    %c0_i32_0 = arith.constant 0 : i32
    %c0_i32_1 = arith.constant 0 : i32
    return %c0_i32, %c0_i32_0 : i32, i32
  }
  func.func @transform_1(%arg0: i32) -> (i32, i32) {
    %c0_i32 = arith.constant 0 : i32
    %c0_i32_0 = arith.constant 0 : i32
    return %arg0, %c0_i32 : i32, i32
  }
  func.func @transform_2(%arg0: i32) -> (i32, i32) {
    %c0_i32 = arith.constant 0 : i32
    %c0_i32_0 = arith.constant 0 : i32
    %c0_i32_1 = arith.constant 0 : i32
    return %c0_i32, %c0_i32_0 : i32, i32
  }
  func.func @transform_3(%arg0: i32) -> (i32, i32) {
    %c0_i32 = arith.constant 0 : i32
    %c0_i32_0 = arith.constant 0 : i32
    %c0_i32_1 = arith.constant 0 : i32
    return %c0_i32, %c0_i32_0 : i32, i32
  }
  func.func @transform_4(%arg0: i32) -> (i32, i32) {
    %c0_i32 = arith.constant 0 : i32
    %c0_i32_0 = arith.constant 0 : i32
    %c0_i32_1 = arith.constant 0 : i32
    return %c0_i32, %c0_i32_0 : i32, i32
  }
  func.func @transform_5(%arg0: i32) -> (i32, i32) {
    %c0_i32 = arith.constant 0 : i32
    %c0_i32_0 = arith.constant 0 : i32
    %c0_i32_1 = arith.constant 0 : i32
    return %c0_i32, %c0_i32_0 : i32, i32
  }
  func.func @transform_6(%arg0: i32) -> (i32, i32) {
    %c0_i32 = arith.constant 0 : i32
    %c0_i32_0 = arith.constant 0 : i32
    return %arg0, %c0_i32 : i32, i32
  }
}

module attributes {stable_mosaic.version = 11 : i64} {
  func.func @quant_mlp_kernel(%arg0: i32, %arg1: memref<1x8xf32, #tpu.memory_space<smem>>, %arg2: memref<16x128xf32, #tpu.memory_space<vmem>>, %arg3: memref<128x512xbf16, #tpu.memory_space<vmem>>, %arg4: memref<1x512xf32, #tpu.memory_space<vmem>>, %arg5: memref<512x128xbf16, #tpu.memory_space<vmem>>, %arg6: memref<1x128xf32, #tpu.memory_space<vmem>>, %arg7: memref<16x128xf32, #tpu.memory_space<vmem>>) attributes {dimension_semantics = [#tpu.dimension_semantics<parallel>], iteration_bounds = array<i64: 1>, scalar_prefetch = 0 : i64, scratch_operands = 0 : i64, tpu.core_type = #tpu.core_type<tc>, window_params = [{transform_indices = @transform_0, window_bounds = array<i64: 1, 8>}, {transform_indices = @transform_1, window_bounds = array<i64: 16, 128>}, {pipeline_mode = #tpu.pipeline_mode<synchronous>, transform_indices = @transform_2, window_bounds = array<i64: 128, 512>}, {pipeline_mode = #tpu.pipeline_mode<synchronous>, transform_indices = @transform_3, window_bounds = array<i64: 1, 512>}, {pipeline_mode = #tpu.pipeline_mode<synchronous>, transform_indices = @transform_4, window_bounds = array<i64: 512, 128>}, {pipeline_mode = #tpu.pipeline_mode<synchronous>, transform_indices = @transform_5, window_bounds = array<i64: 1, 128>}, {transform_indices = @transform_6, window_bounds = array<i64: 16, 128>}]} {
    %c0 = arith.constant 0 : index
    %c0_0 = arith.constant 0 : index
    %0 = memref.load %arg1[%c0, %c0_0] : memref<1x8xf32, #tpu.memory_space<smem>>
    %c0_1 = arith.constant 0 : index
    %c1 = arith.constant 1 : index
    %1 = memref.load %arg1[%c0_1, %c1] : memref<1x8xf32, #tpu.memory_space<smem>>
    %c0_2 = arith.constant 0 : index
    %c2 = arith.constant 2 : index
    %2 = memref.load %arg1[%c0_2, %c2] : memref<1x8xf32, #tpu.memory_space<smem>>
    %c0_3 = arith.constant 0 : index
    %c3 = arith.constant 3 : index
    %3 = memref.load %arg1[%c0_3, %c3] : memref<1x8xf32, #tpu.memory_space<smem>>
    %c0_4 = arith.constant 0 : index
    %c4 = arith.constant 4 : index
    %4 = memref.load %arg1[%c0_4, %c4] : memref<1x8xf32, #tpu.memory_space<smem>>
    %c0_5 = arith.constant 0 : index
    %c5 = arith.constant 5 : index
    %5 = memref.load %arg1[%c0_5, %c5] : memref<1x8xf32, #tpu.memory_space<smem>>
    %c0_6 = arith.constant 0 : index
    %c0_7 = arith.constant 0 : index
    %6 = vector.load %arg2[%c0_6, %c0_7] : memref<16x128xf32, #tpu.memory_space<vmem>>, vector<16x128xf32>
    %c0_8 = arith.constant 0 : index
    %c0_9 = arith.constant 0 : index
    %7 = vector.load %arg4[%c0_8, %c0_9] : memref<1x512xf32, #tpu.memory_space<vmem>>, vector<1x512xf32>
    %8 = vector.broadcast %0 : f32 to vector<16x128xf32>
    %9 = arith.mulf %6, %8 : vector<16x128xf32>
    %10 = math.roundeven %9 : vector<16x128xf32>
    %cst = arith.constant -1.280000e+02 : f32
    %cst_10 = arith.constant 1.270000e+02 : f32
    %11 = vector.broadcast %cst : f32 to vector<16x128xf32>
    %12 = arith.maximumf %11, %10 : vector<16x128xf32>
    %13 = vector.broadcast %cst_10 : f32 to vector<16x128xf32>
    %14 = arith.minimumf %13, %12 : vector<16x128xf32>
    %15 = arith.truncf %14 : vector<16x128xf32> to vector<16x128xbf16>
    %c0_11 = arith.constant 0 : index
    %c0_12 = arith.constant 0 : index
    %16 = vector.load %arg3[%c0_11, %c0_12] : memref<128x512xbf16, #tpu.memory_space<vmem>>, vector<128x512xbf16>
    %cst_13 = arith.constant dense<0.000000e+00> : vector<16x512xf32>
    %17 = tpu.matmul %15, %16, %cst_13 {dimension_numbers = #tpu.dot_dimension_numbers<[1], [0], [0], [1], [0, 0, 1, 1], [], []>} : vector<16x128xbf16>, vector<128x512xbf16>, vector<16x512xf32> -> vector<16x512xf32>
    %18 = vector.broadcast %7 : vector<1x512xf32> to vector<16x512xf32>
    %19 = arith.addf %17, %18 : vector<16x512xf32>
    %20 = math.absf %19 : vector<16x512xf32>
    %cst_14 = arith.constant 0.000000e+00 : f32
    %21 = arith.subf %cst_14, %1 : f32
    %22 = vector.broadcast %21 : f32 to vector<16x512xf32>
    %23 = arith.minimumf %20, %22 : vector<16x512xf32>
    %24 = vector.broadcast %1 : f32 to vector<16x512xf32>
    %25 = arith.addf %23, %24 : vector<16x512xf32>
    %26 = arith.mulf %25, %25 : vector<16x512xf32>
    %27 = vector.broadcast %2 : f32 to vector<16x512xf32>
    %28 = arith.addf %26, %27 : vector<16x512xf32>
    %cst_15 = arith.constant 0.000000e+00 : f32
    %29 = vector.broadcast %cst_15 : f32 to vector<16x512xf32>
    %30 = arith.cmpf olt, %19, %29 : vector<16x512xf32>
    %cst_16 = arith.constant 0.000000e+00 : f32
    %31 = vector.broadcast %cst_16 : f32 to vector<16x512xf32>
    %32 = arith.subf %31, %28 : vector<16x512xf32>
    %33 = arith.select %30, %32, %28 : vector<16x512xi1>, vector<16x512xf32>
    %cst_17 = arith.constant 6.10351563E-5 : f32
    %34 = vector.broadcast %cst_17 : f32 to vector<16x512xf32>
    %35 = arith.mulf %33, %34 : vector<16x512xf32>
    %36 = math.floor %35 : vector<16x512xf32>
    %37 = vector.broadcast %3 : f32 to vector<16x512xf32>
    %38 = arith.addf %36, %37 : vector<16x512xf32>
    %39 = arith.mulf %19, %38 : vector<16x512xf32>
    %40 = vector.broadcast %4 : f32 to vector<16x512xf32>
    %41 = arith.mulf %39, %40 : vector<16x512xf32>
    %42 = math.roundeven %41 : vector<16x512xf32>
    %cst_18 = arith.constant -1.280000e+02 : f32
    %cst_19 = arith.constant 1.270000e+02 : f32
    %43 = vector.broadcast %cst_18 : f32 to vector<16x512xf32>
    %44 = arith.maximumf %43, %42 : vector<16x512xf32>
    %45 = vector.broadcast %cst_19 : f32 to vector<16x512xf32>
    %46 = arith.minimumf %45, %44 : vector<16x512xf32>
    %47 = arith.truncf %46 : vector<16x512xf32> to vector<16x512xbf16>
    %c0_20 = arith.constant 0 : index
    %c0_21 = arith.constant 0 : index
    %48 = vector.load %arg5[%c0_20, %c0_21] : memref<512x128xbf16, #tpu.memory_space<vmem>>, vector<512x128xbf16>
    %cst_22 = arith.constant dense<0.000000e+00> : vector<16x128xf32>
    %49 = tpu.matmul %47, %48, %cst_22 {dimension_numbers = #tpu.dot_dimension_numbers<[1], [0], [0], [1], [0, 0, 1, 1], [], []>} : vector<16x512xbf16>, vector<512x128xbf16>, vector<16x128xf32> -> vector<16x128xf32>
    %c0_23 = arith.constant 0 : index
    %c0_24 = arith.constant 0 : index
    %50 = vector.load %arg6[%c0_23, %c0_24] : memref<1x128xf32, #tpu.memory_space<vmem>>, vector<1x128xf32>
    %51 = vector.broadcast %50 : vector<1x128xf32> to vector<16x128xf32>
    %52 = arith.addf %49, %51 : vector<16x128xf32>
    %53 = vector.broadcast %5 : f32 to vector<16x128xf32>
    %54 = arith.mulf %52, %53 : vector<16x128xf32>
    %c0_25 = arith.constant 0 : index
    %c0_26 = arith.constant 0 : index
    %55 = vector.load %arg7[%c0_25, %c0_26] : memref<16x128xf32, #tpu.memory_space<vmem>>, vector<16x128xf32>
    tpu.vector_store %arg7[%c0_25, %c0_26], %54 {strides = array<i32>} : memref<16x128xf32, #tpu.memory_space<vmem>>, vector<16x128xf32>,
    return
  }
  func.func @transform_0(%arg0: i32) -> (i32, i32) {
    %c0_i32 = arith.constant 0 : i32
    %c0_i32_0 = arith.constant 0 : i32
    %c0_i32_1 = arith.constant 0 : i32
    return %c0_i32, %c0_i32_0 : i32, i32
  }
  func.func @transform_1(%arg0: i32) -> (i32, i32) {
    %c0_i32 = arith.constant 0 : i32
    %c0_i32_0 = arith.constant 0 : i32
    return %arg0, %c0_i32 : i32, i32
  }
  func.func @transform_2(%arg0: i32) -> (i32, i32) {
    %c0_i32 = arith.constant 0 : i32
    %c0_i32_0 = arith.constant 0 : i32
    %c0_i32_1 = arith.constant 0 : i32
    return %c0_i32, %c0_i32_0 : i32, i32
  }
  func.func @transform_3(%arg0: i32) -> (i32, i32) {
    %c0_i32 = arith.constant 0 : i32
    %c0_i32_0 = arith.constant 0 : i32
    %c0_i32_1 = arith.constant 0 : i32
    return %c0_i32, %c0_i32_0 : i32, i32
  }
  func.func @transform_4(%arg0: i32) -> (i32, i32) {
    %c0_i32 = arith.constant 0 : i32
    %c0_i32_0 = arith.constant 0 : i32
    %c0_i32_1 = arith.constant 0 : i32
    return %c0_i32, %c0_i32_0 : i32, i32
  }
  func.func @transform_5(%arg0: i32) -> (i32, i32) {
    %c0_i32 = arith.constant 0 : i32
    %c0_i32_0 = arith.constant 0 : i32
    %c0_i32_1 = arith.constant 0 : i32
    return %c0_i32, %c0_i32_0 : i32, i32
  }
  func.func @transform_6(%arg0: i32) -> (i32, i32) {
    %c0_i32 = arith.constant 0 : i32
    %c0_i32_0 = arith.constant 0 : i32
    return %arg0, %c0_i32 : i32, i32
  }
}

</mosaic_0001>

<llo_original>
// kernel: tpu_custom_call.1
$region0: #{tpu_custom_call.1}
  #allocation0 [shape = 'u32[]', space=smem, size = 0x4, offset = 0x4, fixed_abs, tag = 'smem constant byte address 0x4 - core index']
  #allocation1 [shape = 'u32[144,128]{1,0:T(1,128)}', space=vmem, size = 0x12000, scoped, tag = 'internal scratch']
  %s0 = inlined_call_operand.hbm [shape: f32[1,8], index: 0, kind: input, shape index: {}]
  %s1 = inlined_call_operand.hbm [shape: f32[16,128], index: 1, kind: input, shape index: {}]
  %s2 = inlined_call_operand.hbm [shape: bf16[128,512], index: 2, kind: input, shape index: {}]
  %s3 = inlined_call_operand.vmem [shape: f32[1,512], index: 3, kind: input, shape index: {}]
  %s4 = inlined_call_operand.hbm [shape: bf16[512,128], index: 4, kind: input, shape index: {}]
  %s5 = inlined_call_operand.vmem [shape: f32[1,128], index: 5, kind: input, shape index: {}]
  %s6 = inlined_call_operand.hbm [shape: f32[16,128], index: 6, kind: output, shape index: {}]
  %s7 = sld [smem:[#allocation0]]
  $region50: #{tpu_custom_call.1} parent=0
    _
  %s9 = ssub.s32 1, %s7
  %s10 = scalar_select 0, %s9, %s7
  $region1: #{tpu_custom_call.1} parent=0
    #allocation2 [shape = 'u8[512]{0}', space=smem, size = 0x200, scoped, tag = 'input window, operand 0, single buffered']
    #allocation3 [shape = 's32[1]{0}', space=sflag, size = 0x4, scoped, tag = 'scoped memory for tpu_custom_call.1']
    #allocation4 [shape = 's32[1]{0}', space=sflag, size = 0x4, scoped, tag = 'scoped memory for tpu_custom_call.1']
    #allocation5 [shape = 's32[1]{0}', space=sflag, size = 0x4, scoped, tag = 'scoped memory for tpu_custom_call.1']
    #allocation6 [shape = 'u8[8192]{0}', space=vmem, size = 0x2000, scoped, tag = 'input window, operand 1, single buffered']
    #allocation7 [shape = 'u8[131072]{0}', space=vmem, size = 0x20000, scoped, tag = 'input window, operand 2, single buffered']
    #allocation8 [shape = 's32[1]{0}', space=sflag, size = 0x4, scoped, tag = 'scoped memory for tpu_custom_call.1']
    #allocation9 [shape = 'u8[131072]{0}', space=vmem, size = 0x20000, scoped, tag = 'input window, operand 4, single buffered']
    #allocation10 [shape = 'u8[8192]{0}', space=vmem, size = 0x2000, scoped, tag = 'output window, operand 0, single buffered']
    %11 = vsyncpa [#allocation5], 0
    %12 = vsyncpa [#allocation3], 0
    %13 = vsyncpa [#allocation8], 0
    %14 = vsyncpa [#allocation4], 0
    // Predicated region
    $region2: #{tpu_custom_call.1} parent=1 // pred_check
      _
    $region3: #{tpu_custom_call.1} parent=1 // pred_check_branch
      %16 = sbr.rel (0) target = $region5
    $region4: #{tpu_custom_call.1} parent=1 // pred_region
      %s18 = ssub.s32 16, 16
      %19 = vsyncadd [#allocation5], %s18
      %22 = dma.hbm_to_smem %s0, 16, [#allocation2], [#allocation5]
    $region5: #{tpu_custom_call.1} parent=1 // pred_fallthru
      _
    // Predicated region
    $region6: #{tpu_custom_call.1} parent=1 // pred_check
      _
    $region7: #{tpu_custom_call.1} parent=1 // pred_check_branch
      %24 = sbr.rel (0) target = $region9
    $region8: #{tpu_custom_call.1} parent=1 // pred_region
      %s26 = ssub.s32 256, 256
      %27 = vsyncadd [#allocation3], %s26
      %s28 = sshll.u32 [#allocation6], 4
      %s29 = int_to_ptr.vmem [resolvable:$true] %s28
      %34 = dma.hbm_to_vmem [thread:$0]  %s1, 256, %s29, [#allocation3], 128, 128, 8
    $region9: #{tpu_custom_call.1} parent=1 // pred_fallthru
      _
    // Predicated region
    $region10: #{tpu_custom_call.1} parent=1 // pred_check
      _
    $region11: #{tpu_custom_call.1} parent=1 // pred_check_branch
      %36 = sbr.rel (0) target = $region13
    $region12: #{tpu_custom_call.1} parent=1 // pred_region
      %s38 = ssub.s32 4096, 4096
      %39 = vsyncadd [#allocation8], %s38
      %s40 = sshll.u32 [#allocation7], 4
      %s41 = int_to_ptr.vmem [resolvable:$true] %s40
      %46 = dma.hbm_to_vmem [thread:$0]  %s2, 4096, %s41, [#allocation8], 256, 256, 16
    $region13: #{tpu_custom_call.1} parent=1 // pred_fallthru
      _
    // Predicated region
    $region14: #{tpu_custom_call.1} parent=1 // pred_check
      _
    $region15: #{tpu_custom_call.1} parent=1 // pred_check_branch
      %48 = sbr.rel (0) target = $region17
    $region16: #{tpu_custom_call.1} parent=1 // pred_region
      _
    $region17: #{tpu_custom_call.1} parent=1 // pred_fallthru
      _
    // Predicated region
    $region18: #{tpu_custom_call.1} parent=1 // pred_check
      _
    $region19: #{tpu_custom_call.1} parent=1 // pred_check_branch
      %50 = sbr.rel (0) target = $region21
    $region20: #{tpu_custom_call.1} parent=1 // pred_region
      %s52 = ssub.s32 4096, 4096
      %53 = vsyncadd [#allocation8], %s52
      %s54 = sshll.u32 [#allocation9], 4
      %s55 = int_to_ptr.vmem [resolvable:$true] %s54
      %60 = dma.hbm_to_vmem [thread:$0]  %s4, 4096, %s55, [#allocation8], 64, 64, 4
    $region21: #{tpu_custom_call.1} parent=1 // pred_fallthru
      _
    // Predicated region
    $region22: #{tpu_custom_call.1} parent=1 // pred_check
      _
    $region23: #{tpu_custom_call.1} parent=1 // pred_check_branch
      %62 = sbr.rel (0) target = $region25
    $region24: #{tpu_custom_call.1} parent=1 // pred_region
      _
    $region25: #{tpu_custom_call.1} parent=1 // pred_fallthru
      _
    // Predicated region
    $region26: #{tpu_custom_call.1} parent=1 // pred_check
      _
    $region27: #{tpu_custom_call.1} parent=1 // pred_check_branch
      %64 = sbr.rel (0) target = $region29
    $region28: #{tpu_custom_call.1} parent=1 // pred_region
      %65 = dma.done [#allocation5], 16
    $region29: #{tpu_custom_call.1} parent=1 // pred_fallthru
      _
    // Predicated region
    $region30: #{tpu_custom_call.1} parent=1 // pred_check
      _
    $region31: #{tpu_custom_call.1} parent=1 // pred_check_branch
      %67 = sbr.rel (0) target = $region33
    $region32: #{tpu_custom_call.1} parent=1 // pred_region
      %68 = dma.done [#allocation3], 256
    $region33: #{tpu_custom_call.1} parent=1 // pred_fallthru
      _
    // Predicated region
    $region34: #{tpu_custom_call.1} parent=1 // pred_check
      _
    $region35: #{tpu_custom_call.1} parent=1 // pred_check_branch
      %70 = sbr.rel (0) target = $region37
    $region36: #{tpu_custom_call.1} parent=1 // pred_region
      %71 = dma.done [#allocation8], 4096
    $region37: #{tpu_custom_call.1} parent=1 // pred_fallthru
      _
    // Predicated region
    $region38: #{tpu_custom_call.1} parent=1 // pred_check
      _
    $region39: #{tpu_custom_call.1} parent=1 // pred_check_branch
      %73 = sbr.rel (0) target = $region41
    $region40: #{tpu_custom_call.1} parent=1 // pred_region
      %74 = dma.done [#allocation8], 4096
    $region41: #{tpu_custom_call.1} parent=1 // pred_fallthru
      _
    %75 = sfence
    %s77 = sld [smem:[#allocation2]]
    %s78 = sld [smem:[#allocation2 + $0x1]]
    %s79 = sld [smem:[#allocation2 + $0x2]]
    %s80 = sld [smem:[#allocation2 + $0x3]]
    %s81 = sld [smem:[#allocation2 + $0x4]]
    %s82 = sld [smem:[#allocation2 + $0x5]]
    %v83 = vld [vmem:[#allocation6] sm:$0xff]
    %v84 = vld [vmem:[#allocation6 + $0x8] sm:$0xff]
    %v85 = vld [vmem:[%s3] sm:$0xf]
    %v86 = vstv %s77
    %v87 = vmul.f32 %v83, %v86
    %v88 = vmul.f32 %v84, %v86
    %v89 = vround.ne.pseudo %v87
    %v90 = vround.ne.pseudo %v88
    %v91 = vmax.f32 %v89, -128.0
    %v92 = vmax.f32 %v90, -128.0
    %v93 = vmin.f32 %v91, 127.0
    %v94 = vmin.f32 %v92, 127.0
    %v95 = vpack.c.bf16 %v94, %v93
    %v96 = vld [vmem:[#allocation7] sm:$0xff]
    %v97 = vld [vmem:[#allocation7 + $0x8] sm:$0xff]
    %v98 = vld [vmem:[#allocation7 + $0x10] sm:$0xff]
    %v99 = vld [vmem:[#allocation7 + $0x18] sm:$0xff]
    %v100 = vld [vmem:[#allocation7 + $0x20] sm:$0xff]
    %v101 = vld [vmem:[#allocation7 + $0x28] sm:$0xff]
    %v102 = vld [vmem:[#allocation7 + $0x30] sm:$0xff]
    %v103 = vld [vmem:[#allocation7 + $0x38] sm:$0xff]
    %v104 = vld [vmem:[#allocation7 + $0x40] sm:$0xff]
    %v105 = vld [vmem:[#allocation7 + $0x48] sm:$0xff]
    %v106 = vld [vmem:[#allocation7 + $0x50] sm:$0xff]
    %v107 = vld [vmem:[#allocation7 + $0x58] sm:$0xff]
    %v108 = vld [vmem:[#allocation7 + $0x60] sm:$0xff]
    %v109 = vld [vmem:[#allocation7 + $0x68] sm:$0xff]
    %v110 = vld [vmem:[#allocation7 + $0x70] sm:$0xff]
    %v111 = vld [vmem:[#allocation7 + $0x78] sm:$0xff]
    %v112 = vld [vmem:[#allocation7 + $0x80] sm:$0xff]
    %v113 = vld [vmem:[#allocation7 + $0x88] sm:$0xff]
    %v114 = vld [vmem:[#allocation7 + $0x90] sm:$0xff]
    %v115 = vld [vmem:[#allocation7 + $0x98] sm:$0xff]
    %v116 = vld [vmem:[#allocation7 + $0xa0] sm:$0xff]
    %v117 = vld [vmem:[#allocation7 + $0xa8] sm:$0xff]
    %v118 = vld [vmem:[#allocation7 + $0xb0] sm:$0xff]
    %v119 = vld [vmem:[#allocation7 + $0xb8] sm:$0xff]
    %v120 = vld [vmem:[#allocation7 + $0xc0] sm:$0xff]
    %v121 = vld [vmem:[#allocation7 + $0xc8] sm:$0xff]
    %v122 = vld [vmem:[#allocation7 + $0xd0] sm:$0xff]
    %v123 = vld [vmem:[#allocation7 + $0xd8] sm:$0xff]
    %v124 = vld [vmem:[#allocation7 + $0xe0] sm:$0xff]
    %v125 = vld [vmem:[#allocation7 + $0xe8] sm:$0xff]
    %v126 = vld [vmem:[#allocation7 + $0xf0] sm:$0xff]
    %v127 = vld [vmem:[#allocation7 + $0xf8] sm:$0xff]
    %v129 = vlaneseq
    %v130 = vshrl.u32 %v129, 7
    %v131 = vsub.s32 0, %v130
    %v132 = vrot.slane %v85, %v131
    %v133 = vlaneseq
    %v134 = vshrl.u32 %v133, 7
    %v135 = vsub.s32 1, %v134
    %v136 = vrot.slane %v85, %v135
    %v137 = vlaneseq
    %v138 = vshrl.u32 %v137, 7
    %v139 = vsub.s32 2, %v138
    %v140 = vrot.slane %v85, %v139
    %v141 = vlaneseq
    %v142 = vshrl.u32 %v141, 7
    %v143 = vsub.s32 3, %v142
    %v144 = vrot.slane %v85, %v143
    %v181 = vunpack.c.l.b16 %v96
    %v182 = vunpack.c.h.b16 %v96
    %v183 = vunpack.c.l.b16 %v97
    %v184 = vunpack.c.h.b16 %v97
    %v185 = vunpack.c.l.b16 %v98
    %v186 = vunpack.c.h.b16 %v98
    %v187 = vunpack.c.l.b16 %v99
    %v188 = vunpack.c.h.b16 %v99
    %v189 = vunpack.c.l.b16 %v100
    %v190 = vunpack.c.h.b16 %v100
    %v191 = vunpack.c.l.b16 %v101
    %v192 = vunpack.c.h.b16 %v101
    %v193 = vunpack.c.l.b16 %v102
    %v194 = vunpack.c.h.b16 %v102
    %v195 = vunpack.c.l.b16 %v103
    %v196 = vunpack.c.h.b16 %v103
    %v197 = vunpack.c.l.b16 %v104
    %v198 = vunpack.c.h.b16 %v104
    %v199 = vunpack.c.l.b16 %v105
    %v200 = vunpack.c.h.b16 %v105
    %v201 = vunpack.c.l.b16 %v106
    %v202 = vunpack.c.h.b16 %v106
    %v203 = vunpack.c.l.b16 %v107
    %v204 = vunpack.c.h.b16 %v107
    %v205 = vunpack.c.l.b16 %v108
    %v206 = vunpack.c.h.b16 %v108
    %v207 = vunpack.c.l.b16 %v109
    %v208 = vunpack.c.h.b16 %v109
    %v209 = vunpack.c.l.b16 %v110
    %v210 = vunpack.c.h.b16 %v110
    %v211 = vunpack.c.l.b16 %v111
    %v212 = vunpack.c.h.b16 %v111
    %v213 = vunpack.c.l.b16 %v112
    %v214 = vunpack.c.h.b16 %v112
    %v215 = vunpack.c.l.b16 %v113
    %v216 = vunpack.c.h.b16 %v113
    %v217 = vunpack.c.l.b16 %v114
    %v218 = vunpack.c.h.b16 %v114
    %v219 = vunpack.c.l.b16 %v115
    %v220 = vunpack.c.h.b16 %v115
    %v221 = vunpack.c.l.b16 %v116
    %v222 = vunpack.c.h.b16 %v116
    %v223 = vunpack.c.l.b16 %v117
    %v224 = vunpack.c.h.b16 %v117
    %v225 = vunpack.c.l.b16 %v118
    %v226 = vunpack.c.h.b16 %v118
    %v227 = vunpack.c.l.b16 %v119
    %v228 = vunpack.c.h.b16 %v119
    %v229 = vunpack.c.l.b16 %v120
    %v230 = vunpack.c.h.b16 %v120
    %v231 = vunpack.c.l.b16 %v121
    %v232 = vunpack.c.h.b16 %v121
    %v233 = vunpack.c.l.b16 %v122
    %v234 = vunpack.c.h.b16 %v122
    %v235 = vunpack.c.l.b16 %v123
    %v236 = vunpack.c.h.b16 %v123
    %v237 = vunpack.c.l.b16 %v124
    %v238 = vunpack.c.h.b16 %v124
    %v239 = vunpack.c.l.b16 %v125
    %v240 = vunpack.c.h.b16 %v125
    %v241 = vunpack.c.l.b16 %v126
    %v242 = vunpack.c.h.b16 %v126
    %v243 = vunpack.c.l.b16 %v127
    %v244 = vunpack.c.h.b16 %v127
    %v245 = vpack.c.b16 %v185, %v181
    %v246 = vpack.c.b16 %v186, %v182
    %v247 = vpack.c.b16 %v187, %v183
    %v248 = vpack.c.b16 %v188, %v184
    %v249 = vpack.c.b16 %v193, %v189
    %v250 = vpack.c.b16 %v194, %v190
    %v251 = vpack.c.b16 %v195, %v191
    %v252 = vpack.c.b16 %v196, %v192
    %v253 = vpack.c.b16 %v201, %v197
    %v254 = vpack.c.b16 %v202, %v198
    %v255 = vpack.c.b16 %v203, %v199
    %v256 = vpack.c.b16 %v204, %v200
    %v257 = vpack.c.b16 %v209, %v205
    %v258 = vpack.c.b16 %v210, %v206
    %v259 = vpack.c.b16 %v211, %v207
    %v260 = vpack.c.b16 %v212, %v208
    %v261 = vpack.c.b16 %v217, %v213
    %v262 = vpack.c.b16 %v218, %v214
    %v263 = vpack.c.b16 %v219, %v215
    %v264 = vpack.c.b16 %v220, %v216
    %v265 = vpack.c.b16 %v225, %v221
    %v266 = vpack.c.b16 %v226, %v222
    %v267 = vpack.c.b16 %v227, %v223
    %v268 = vpack.c.b16 %v228, %v224
    %v269 = vpack.c.b16 %v233, %v229
    %v270 = vpack.c.b16 %v234, %v230
    %v271 = vpack.c.b16 %v235, %v231
    %v272 = vpack.c.b16 %v236, %v232
    %v273 = vpack.c.b16 %v241, %v237
    %v274 = vpack.c.b16 %v242, %v238
    %v275 = vpack.c.b16 %v243, %v239
    %v276 = vpack.c.b16 %v244, %v240
    %309 = vmatprep.subr.bf16.mxu0 %v274
    %310 = vmatpush1.bf16.msra.mxu0 %v273
    %311 = vmatprep.subr.bf16.mxu0 %v270
    %312 = vmatpush1.bf16.msra.mxu0 %v269
    %313 = vmatprep.subr.bf16.mxu0 %v266
    %314 = vmatpush1.bf16.msra.mxu0 %v265
    %315 = vmatprep.subr.bf16.mxu0 %v262
    %316 = vmatpush1.bf16.msra.mxu0 %v261
    %317 = vmatprep.subr.bf16.mxu0 %v258
    %318 = vmatpush1.bf16.msra.mxu0 %v257
    %319 = vmatprep.subr.bf16.mxu0 %v254
    %320 = vmatpush1.bf16.msra.mxu0 %v253
    %321 = vmatprep.subr.bf16.mxu0 %v250
    %322 = vmatpush1.bf16.msra.mxu0 %v249
    %323 = vmatprep.subr.bf16.mxu0 %v246
    %324 = vmatpush1.bf16.msra.mxu0 %v245
    %325 = vmatprep.subr.bf16.mxu0 0
    %326 = vmatpush2.bf16.msra.mxu0 0
    %327 = vmatprep.subr.bf16.mxu0 0
    %328 = vmatpush2.bf16.msra.mxu0 0
    %329 = vmatprep.subr.bf16.mxu0 0
    %330 = vmatpush2.bf16.msra.mxu0 0
    %331 = vmatprep.subr.bf16.mxu0 0
    %332 = vmatpush2.bf16.msra.mxu0 0
    %333 = vmatprep.subr.bf16.mxu0 0
    %334 = vmatpush2.bf16.msra.mxu0 0
    %335 = vmatprep.subr.bf16.mxu0 0
    %336 = vmatpush2.bf16.msra.mxu0 0
    %337 = vmatprep.subr.bf16.mxu0 0
    %338 = vmatpush2.bf16.msra.mxu0 0
    %339 = vmatprep.subr.bf16.mxu0 0
    %340 = vmatpush2.bf16.msra.mxu0 0
    %341 = vmatprep.mubr.bf16.mxu0 0
    %342 = vmatmul.mubr.bf16.gmra.mxu0 %v95
    %v343 = vpop.f32.mrf.mxu0
    %v344 = vadd.f32 %v132, %v343
    %v345 = vpop.f32.mrf.mxu0
    %v346 = vadd.f32 %v136, %v345
    %v347 = vpop.f32.mrf.mxu0
    %v348 = vadd.f32 %v132, %v347
    %v349 = vpop.f32.mrf.mxu0
    %v350 = vadd.f32 %v136, %v349
    %351 = vdwg.mxu0
    %352 = vmatprep.subr.bf16.mxu0 %v276
    %353 = vmatpush1.bf16.msra.mxu0 %v275
    %354 = vmatprep.subr.bf16.mxu0 %v272
    %355 = vmatpush1.bf16.msra.mxu0 %v271
    %356 = vmatprep.subr.bf16.mxu0 %v268
    %357 = vmatpush1.bf16.msra.mxu0 %v267
    %358 = vmatprep.subr.bf16.mxu0 %v264
    %359 = vmatpush1.bf16.msra.mxu0 %v263
    %360 = vmatprep.subr.bf16.mxu0 %v260
    %361 = vmatpush1.bf16.msra.mxu0 %v259
    %362 = vmatprep.subr.bf16.mxu0 %v256
    %363 = vmatpush1.bf16.msra.mxu0 %v255
    %364 = vmatprep.subr.bf16.mxu0 %v252
    %365 = vmatpush1.bf16.msra.mxu0 %v251
    %366 = vmatprep.subr.bf16.mxu0 %v248
    %367 = vmatpush1.bf16.msra.mxu0 %v247
    %368 = vmatprep.subr.bf16.mxu0 0
    %369 = vmatpush2.bf16.msra.mxu0 0
    %370 = vmatprep.subr.bf16.mxu0 0
    %371 = vmatpush2.bf16.msra.mxu0 0
    %372 = vmatprep.subr.bf16.mxu0 0
    %373 = vmatpush2.bf16.msra.mxu0 0
    %374 = vmatprep.subr.bf16.mxu0 0
    %375 = vmatpush2.bf16.msra.mxu0 0
    %376 = vmatprep.subr.bf16.mxu0 0
    %377 = vmatpush2.bf16.msra.mxu0 0
    %378 = vmatprep.subr.bf16.mxu0 0
    %379 = vmatpush2.bf16.msra.mxu0 0
    %380 = vmatprep.subr.bf16.mxu0 0
    %381 = vmatpush2.bf16.msra.mxu0 0
    %382 = vmatprep.subr.bf16.mxu0 0
    %383 = vmatpush2.bf16.msra.mxu0 0
    %384 = vmatprep.mubr.bf16.mxu0 0
    %385 = vmatmul.mubr.bf16.gmra.mxu0 %v95
    %v386 = vpop.f32.mrf.mxu0
    %v387 = vadd.f32 %v140, %v386
    %v388 = vpop.f32.mrf.mxu0
    %v389 = vadd.f32 %v144, %v388
    %v390 = vpop.f32.mrf.mxu0
    %v391 = vadd.f32 %v140, %v390
    %v392 = vpop.f32.mrf.mxu0
    %v393 = vadd.f32 %v144, %v392
    %394 = vdwg.mxu0
    %v395 = vand.u32 2147483647, %v344
    %v396 = vand.u32 2147483647, %v346
    %v397 = vand.u32 2147483647, %v387
    %v398 = vand.u32 2147483647, %v389
    %v399 = vand.u32 2147483647, %v348
    %v400 = vand.u32 2147483647, %v350
    %v401 = vand.u32 2147483647, %v391
    %v402 = vand.u32 2147483647, %v393
    %s403 = ssub.f32 0.0, %s78
    %v404 = vstv %s403
    %v405 = vmin.f32 %v395, %v404
    %v406 = vmin.f32 %v396, %v404
    %v407 = vmin.f32 %v397, %v404
    %v408 = vmin.f32 %v398, %v404
    %v409 = vmin.f32 %v399, %v404
    %v410 = vmin.f32 %v400, %v404
    %v411 = vmin.f32 %v401, %v404
    %v412 = vmin.f32 %v402, %v404
    %v413 = vstv %s78
    %v414 = vadd.f32 %v405, %v413
    %v415 = vadd.f32 %v406, %v413
    %v416 = vadd.f32 %v407, %v413
    %v417 = vadd.f32 %v408, %v413
    %v418 = vadd.f32 %v409, %v413
    %v419 = vadd.f32 %v410, %v413
    %v420 = vadd.f32 %v411, %v413
    %v421 = vadd.f32 %v412, %v413
    %v422 = vmul.f32 %v414, %v414
    %v423 = vmul.f32 %v415, %v415
    %v424 = vmul.f32 %v416, %v416
    %v425 = vmul.f32 %v417, %v417
    %v426 = vmul.f32 %v418, %v418
    %v427 = vmul.f32 %v419, %v419
    %v428 = vmul.f32 %v420, %v420
    %v429 = vmul.f32 %v421, %v421
    %v430 = vstv %s79
    %v431 = vadd.f32 %v422, %v430
    %v432 = vadd.f32 %v423, %v430
    %v433 = vadd.f32 %v424, %v430
    %v434 = vadd.f32 %v425, %v430
    %v435 = vadd.f32 %v426, %v430
    %v436 = vadd.f32 %v427, %v430
    %v437 = vadd.f32 %v428, %v430
    %v438 = vadd.f32 %v429, %v430
    %vm439 = vcmp.lt.f32.partialorder %v344, 0.0
    %vm440 = vcmp.lt.f32.partialorder %v346, 0.0
    %vm441 = vcmp.lt.f32.partialorder %v387, 0.0
    %vm442 = vcmp.lt.f32.partialorder %v389, 0.0
    %vm443 = vcmp.lt.f32.partialorder %v348, 0.0
    %vm444 = vcmp.lt.f32.partialorder %v350, 0.0
    %vm445 = vcmp.lt.f32.partialorder %v391, 0.0
    %vm446 = vcmp.lt.f32.partialorder %v393, 0.0
    %v447 = vsub.f32 0.0, %v431
    %v448 = vsub.f32 0.0, %v432
    %v449 = vsub.f32 0.0, %v433
    %v450 = vsub.f32 0.0, %v434
    %v451 = vsub.f32 0.0, %v435
    %v452 = vsub.f32 0.0, %v436
    %v453 = vsub.f32 0.0, %v437
    %v454 = vsub.f32 0.0, %v438
    %v455 = vsel %vm439, %v447, %v431
    %v456 = vsel %vm440, %v448, %v432
    %v457 = vsel %vm441, %v449, %v433
    %v458 = vsel %vm442, %v450, %v434
    %v459 = vsel %vm443, %v451, %v435
    %v460 = vsel %vm444, %v452, %v436
    %v461 = vsel %vm445, %v453, %v437
    %v462 = vsel %vm446, %v454, %v438
    %v463 = vmul.f32 %v455, 6.1035156e-05
    %v464 = vmul.f32 %v456, 6.1035156e-05
    %v465 = vmul.f32 %v457, 6.1035156e-05
    %v466 = vmul.f32 %v458, 6.1035156e-05
    %v467 = vmul.f32 %v459, 6.1035156e-05
    %v468 = vmul.f32 %v460, 6.1035156e-05
    %v469 = vmul.f32 %v461, 6.1035156e-05
    %v470 = vmul.f32 %v462, 6.1035156e-05
    %v471 = vfloor.f32 %v463
    %v472 = vfloor.f32 %v464
    %v473 = vfloor.f32 %v465
    %v474 = vfloor.f32 %v466
    %v475 = vfloor.f32 %v467
    %v476 = vfloor.f32 %v468
    %v477 = vfloor.f32 %v469
    %v478 = vfloor.f32 %v470
    %v479 = vstv %s80
    %v480 = vadd.f32 %v471, %v479
    %v481 = vadd.f32 %v472, %v479
    %v482 = vadd.f32 %v473, %v479
    %v483 = vadd.f32 %v474, %v479
    %v484 = vadd.f32 %v475, %v479
    %v485 = vadd.f32 %v476, %v479
    %v486 = vadd.f32 %v477, %v479
    %v487 = vadd.f32 %v478, %v479
    %v488 = vmul.f32 %v344, %v480
    %v489 = vmul.f32 %v346, %v481
    %v490 = vmul.f32 %v387, %v482
    %v491 = vmul.f32 %v389, %v483
    %v492 = vmul.f32 %v348, %v484
    %v493 = vmul.f32 %v350, %v485
    %v494 = vmul.f32 %v391, %v486
    %v495 = vmul.f32 %v393, %v487
    %v496 = vstv %s81
    %v497 = vmul.f32 %v488, %v496
    %v498 = vmul.f32 %v489, %v496
    %v499 = vmul.f32 %v490, %v496
    %v500 = vmul.f32 %v491, %v496
    %v501 = vmul.f32 %v492, %v496
    %v502 = vmul.f32 %v493, %v496
    %v503 = vmul.f32 %v494, %v496
    %v504 = vmul.f32 %v495, %v496
    %v505 = vround.ne.pseudo %v497
    %v506 = vround.ne.pseudo %v498
    %v507 = vround.ne.pseudo %v499
    %v508 = vround.ne.pseudo %v500
    %v509 = vround.ne.pseudo %v501
    %v510 = vround.ne.pseudo %v502
    %v511 = vround.ne.pseudo %v503
    %v512 = vround.ne.pseudo %v504
    %v513 = vmax.f32 %v505, -128.0
    %v514 = vmax.f32 %v506, -128.0
    %v515 = vmax.f32 %v507, -128.0
    %v516 = vmax.f32 %v508, -128.0
    %v517 = vmax.f32 %v509, -128.0
    %v518 = vmax.f32 %v510, -128.0
    %v519 = vmax.f32 %v511, -128.0
    %v520 = vmax.f32 %v512, -128.0
    %v521 = vmin.f32 %v513, 127.0
    %v522 = vmin.f32 %v514, 127.0
    %v523 = vmin.f32 %v515, 127.0
    %v524 = vmin.f32 %v516, 127.0
    %v525 = vmin.f32 %v517, 127.0
    %v526 = vmin.f32 %v518, 127.0
    %v527 = vmin.f32 %v519, 127.0
    %v528 = vmin.f32 %v520, 127.0
    %v529 = vpack.c.bf16 %v525, %v521
    %v530 = vpack.c.bf16 %v526, %v522
    %v531 = vpack.c.bf16 %v527, %v523
    %v532 = vpack.c.bf16 %v528, %v524
    %v533 = vld [vmem:[#allocation9] sm:$0xf]
    %v534 = vld [vmem:[#allocation9 + $0x4] sm:$0xf]
    %v535 = vld [vmem:[#allocation9 + $0x8] sm:$0xf]
    %v536 = vld [vmem:[#allocation9 + $0xc] sm:$0xf]
    %v537 = vld [vmem:[#allocation9 + $0x10] sm:$0xf]
    %v538 = vld [vmem:[#allocation9 + $0x14] sm:$0xf]
    %v539 = vld [vmem:[#allocation9 + $0x18] sm:$0xf]
    %v540 = vld [vmem:[#allocation9 + $0x1c] sm:$0xf]
    %v541 = vld [vmem:[#allocation9 + $0x20] sm:$0xf]
    %v542 = vld [vmem:[#allocation9 + $0x24] sm:$0xf]
    %v543 = vld [vmem:[#allocation9 + $0x28] sm:$0xf]
    %v544 = vld [vmem:[#allocation9 + $0x2c] sm:$0xf]
    %v545 = vld [vmem:[#allocation9 + $0x30] sm:$0xf]
    %v546 = vld [vmem:[#allocation9 + $0x34] sm:$0xf]
    %v547 = vld [vmem:[#allocation9 + $0x38] sm:$0xf]
    %v548 = vld [vmem:[#allocation9 + $0x3c] sm:$0xf]
    %v549 = vld [vmem:[#allocation9 + $0x40] sm:$0xf]
    %v550 = vld [vmem:[#allocation9 + $0x44] sm:$0xf]
    %v551 = vld [vmem:[#allocation9 + $0x48] sm:$0xf]
    %v552 = vld [vmem:[#allocation9 + $0x4c] sm:$0xf]
    %v553 = vld [vmem:[#allocation9 + $0x50] sm:$0xf]
    %v554 = vld [vmem:[#allocation9 + $0x54] sm:$0xf]
    %v555 = vld [vmem:[#allocation9 + $0x58] sm:$0xf]
    %v556 = vld [vmem:[#allocation9 + $0x5c] sm:$0xf]
    %v557 = vld [vmem:[#allocation9 + $0x60] sm:$0xf]
    %v558 = vld [vmem:[#allocation9 + $0x64] sm:$0xf]
    %v559 = vld [vmem:[#allocation9 + $0x68] sm:$0xf]
    %v560 = vld [vmem:[#allocation9 + $0x6c] sm:$0xf]
    %v561 = vld [vmem:[#allocation9 + $0x70] sm:$0xf]
    %v562 = vld [vmem:[#allocation9 + $0x74] sm:$0xf]
    %v563 = vld [vmem:[#allocation9 + $0x78] sm:$0xf]
    %v564 = vld [vmem:[#allocation9 + $0x7c] sm:$0xf]
    %v565 = vld [vmem:[#allocation9 + $0x80] sm:$0xf]
    %v566 = vld [vmem:[#allocation9 + $0x84] sm:$0xf]
    %v567 = vld [vmem:[#allocation9 + $0x88] sm:$0xf]
    %v568 = vld [vmem:[#allocation9 + $0x8c] sm:$0xf]
    %v569 = vld [vmem:[#allocation9 + $0x90] sm:$0xf]
    %v570 = vld [vmem:[#allocation9 + $0x94] sm:$0xf]
    %v571 = vld [vmem:[#allocation9 + $0x98] sm:$0xf]
    %v572 = vld [vmem:[#allocation9 + $0x9c] sm:$0xf]
    %v573 = vld [vmem:[#allocation9 + $0xa0] sm:$0xf]
    %v574 = vld [vmem:[#allocation9 + $0xa4] sm:$0xf]
    %v575 = vld [vmem:[#allocation9 + $0xa8] sm:$0xf]
    %v576 = vld [vmem:[#allocation9 + $0xac] sm:$0xf]
    %v577 = vld [vmem:[#allocation9 + $0xb0] sm:$0xf]
    %v578 = vld [vmem:[#allocation9 + $0xb4] sm:$0xf]
    %v579 = vld [vmem:[#allocation9 + $0xb8] sm:$0xf]
    %v580 = vld [vmem:[#allocation9 + $0xbc] sm:$0xf]
    %v581 = vld [vmem:[#allocation9 + $0xc0] sm:$0xf]
    %v582 = vld [vmem:[#allocation9 + $0xc4] sm:$0xf]
    %v583 = vld [vmem:[#allocation9 + $0xc8] sm:$0xf]
    %v584 = vld [vmem:[#allocation9 + $0xcc] sm:$0xf]
    %v585 = vld [vmem:[#allocation9 + $0xd0] sm:$0xf]
    %v586 = vld [vmem:[#allocation9 + $0xd4] sm:$0xf]
    %v587 = vld [vmem:[#allocation9 + $0xd8] sm:$0xf]
    %v588 = vld [vmem:[#allocation9 + $0xdc] sm:$0xf]
    %v589 = vld [vmem:[#allocation9 + $0xe0] sm:$0xf]
    %v590 = vld [vmem:[#allocation9 + $0xe4] sm:$0xf]
    %v591 = vld [vmem:[#allocation9 + $0xe8] sm:$0xf]
    %v592 = vld [vmem:[#allocation9 + $0xec] sm:$0xf]
    %v593 = vld [vmem:[#allocation9 + $0xf0] sm:$0xf]
    %v594 = vld [vmem:[#allocation9 + $0xf4] sm:$0xf]
    %v595 = vld [vmem:[#allocation9 + $0xf8] sm:$0xf]
    %v596 = vld [vmem:[#allocation9 + $0xfc] sm:$0xf]
    %v597 = vld [vmem:[%s5] sm:$0x1]
    %v599 = vlaneseq
    %v600 = vshrl.u32 %v599, 7
    %v601 = vsub.s32 0, %v600
    %v602 = vrot.slane %v597, %v601
    %v668 = vunpack.c.l.b16 %v533
    %v669 = vunpack.c.l.b16 %v534
    %v670 = vunpack.c.l.b16 %v535
    %v671 = vunpack.c.l.b16 %v536
    %v672 = vunpack.c.l.b16 %v537
    %v673 = vunpack.c.l.b16 %v538
    %v674 = vunpack.c.l.b16 %v539
    %v675 = vunpack.c.l.b16 %v540
    %v676 = vunpack.c.l.b16 %v541
    %v677 = vunpack.c.l.b16 %v542
    %v678 = vunpack.c.l.b16 %v543
    %v679 = vunpack.c.l.b16 %v544
    %v680 = vunpack.c.l.b16 %v545
    %v681 = vunpack.c.l.b16 %v546
    %v682 = vunpack.c.l.b16 %v547
    %v683 = vunpack.c.l.b16 %v548
    %v684 = vunpack.c.l.b16 %v549
    %v685 = vunpack.c.l.b16 %v550
    %v686 = vunpack.c.l.b16 %v551
    %v687 = vunpack.c.l.b16 %v552
    %v688 = vunpack.c.l.b16 %v553
    %v689 = vunpack.c.l.b16 %v554
    %v690 = vunpack.c.l.b16 %v555
    %v691 = vunpack.c.l.b16 %v556
    %v692 = vunpack.c.l.b16 %v557
    %v693 = vunpack.c.l.b16 %v558
    %v694 = vunpack.c.l.b16 %v559
    %v695 = vunpack.c.l.b16 %v560
    %v696 = vunpack.c.l.b16 %v561
    %v697 = vunpack.c.l.b16 %v562
    %v698 = vunpack.c.l.b16 %v563
    %v699 = vunpack.c.l.b16 %v564
    %v700 = vunpack.c.l.b16 %v565
    %v701 = vunpack.c.l.b16 %v566
    %v702 = vunpack.c.l.b16 %v567
    %v703 = vunpack.c.l.b16 %v568
    %v704 = vunpack.c.l.b16 %v569
    %v705 = vunpack.c.l.b16 %v570
    %v706 = vunpack.c.l.b16 %v571
    %v707 = vunpack.c.l.b16 %v572
    %v708 = vunpack.c.l.b16 %v573
    %v709 = vunpack.c.l.b16 %v574
    %v710 = vunpack.c.l.b16 %v575
    %v711 = vunpack.c.l.b16 %v576
    %v712 = vunpack.c.l.b16 %v577
    %v713 = vunpack.c.l.b16 %v578
    %v714 = vunpack.c.l.b16 %v579
    %v715 = vunpack.c.l.b16 %v580
    %v716 = vunpack.c.l.b16 %v581
    %v717 = vunpack.c.l.b16 %v582
    %v718 = vunpack.c.l.b16 %v583
    %v719 = vunpack.c.l.b16 %v584
    %v720 = vunpack.c.l.b16 %v585
    %v721 = vunpack.c.l.b16 %v586
    %v722 = vunpack.c.l.b16 %v587
    %v723 = vunpack.c.l.b16 %v588
    %v724 = vunpack.c.l.b16 %v589
    %v725 = vunpack.c.l.b16 %v590
    %v726 = vunpack.c.l.b16 %v591
    %v727 = vunpack.c.l.b16 %v592
    %v728 = vunpack.c.l.b16 %v593
    %v729 = vunpack.c.l.b16 %v594
    %v730 = vunpack.c.l.b16 %v595
    %v731 = vunpack.c.l.b16 %v596
    %v732 = vpack.c.b16 %v669, %v668
    %v733 = vpack.c.b16 %v671, %v670
    %v734 = vpack.c.b16 %v673, %v672
    %v735 = vpack.c.b16 %v675, %v674
    %v736 = vpack.c.b16 %v677, %v676
    %v737 = vpack.c.b16 %v679, %v678
    %v738 = vpack.c.b16 %v681, %v680
    %v739 = vpack.c.b16 %v683, %v682
    %v740 = vpack.c.b16 %v685, %v684
    %v741 = vpack.c.b16 %v687, %v686
    %v742 = vpack.c.b16 %v689, %v688
    %v743 = vpack.c.b16 %v691, %v690
    %v744 = vpack.c.b16 %v693, %v692
    %v745 = vpack.c.b16 %v695, %v694
    %v746 = vpack.c.b16 %v697, %v696
    %v747 = vpack.c.b16 %v699, %v698
    %v748 = vpack.c.b16 %v701, %v700
    %v749 = vpack.c.b16 %v703, %v702
    %v750 = vpack.c.b16 %v705, %v704
    %v751 = vpack.c.b16 %v707, %v706
    %v752 = vpack.c.b16 %v709, %v708
    %v753 = vpack.c.b16 %v711, %v710
    %v754 = vpack.c.b16 %v713, %v712
    %v755 = vpack.c.b16 %v715, %v714
    %v756 = vpack.c.b16 %v717, %v716
    %v757 = vpack.c.b16 %v719, %v718
    %v758 = vpack.c.b16 %v721, %v720
    %v759 = vpack.c.b16 %v723, %v722
    %v760 = vpack.c.b16 %v725, %v724
    %v761 = vpack.c.b16 %v727, %v726
    %v762 = vpack.c.b16 %v729, %v728
    %v763 = vpack.c.b16 %v731, %v730
    %796 = vmatprep.subr.bf16.mxu0 0
    %797 = vmatpush1.bf16.msra.mxu0 %v739
    %798 = vmatprep.subr.bf16.mxu0 0
    %799 = vmatpush1.bf16.msra.mxu0 %v738
    %800 = vmatprep.subr.bf16.mxu0 0
    %801 = vmatpush1.bf16.msra.mxu0 %v737
    %802 = vmatprep.subr.bf16.mxu0 0
    %803 = vmatpush1.bf16.msra.mxu0 %v736
    %804 = vmatprep.subr.bf16.mxu0 0
    %805 = vmatpush1.bf16.msra.mxu0 %v735
    %806 = vmatprep.subr.bf16.mxu0 0
    %807 = vmatpush1.bf16.msra.mxu0 %v734
    %808 = vmatprep.subr.bf16.mxu0 0
    %809 = vmatpush1.bf16.msra.mxu0 %v733
    %810 = vmatprep.subr.bf16.mxu0 0
    %811 = vmatpush1.bf16.msra.mxu0 %v732
    %812 = vmatprep.subr.bf16.mxu0 0
    %813 = vmatpush2.bf16.msra.mxu0 %v747
    %814 = vmatprep.subr.bf16.mxu0 0
    %815 = vmatpush2.bf16.msra.mxu0 %v746
    %816 = vmatprep.subr.bf16.mxu0 0
    %817 = vmatpush2.bf16.msra.mxu0 %v745
    %818 = vmatprep.subr.bf16.mxu0 0
    %819 = vmatpush2.bf16.msra.mxu0 %v744
    %820 = vmatprep.subr.bf16.mxu0 0
    %821 = vmatpush2.bf16.msra.mxu0 %v743
    %822 = vmatprep.subr.bf16.mxu0 0
    %823 = vmatpush2.bf16.msra.mxu0 %v742
    %824 = vmatprep.subr.bf16.mxu0 0
    %825 = vmatpush2.bf16.msra.mxu0 %v741
    %826 = vmatprep.subr.bf16.mxu0 0
    %827 = vmatpush2.bf16.msra.mxu0 %v740
    %828 = vmatprep.mubr.bf16.mxu0 %v530
    %829 = vmatmul.mubr.bf16.gmra.mxu0 %v529
    %v830 = vpop.f32.mrf.mxu0
    %v831 = vadd.f32 %v602, %v830
    %v832 = vpop.f32.mrf.mxu0
    %v833 = vpop.f32.mrf.mxu0
    %v834 = vadd.f32 %v602, %v833
    %v835 = vpop.f32.mrf.mxu0
    %836 = vdwg.mxu0
    %837 = vmatprep.subr.bf16.mxu0 0
    %838 = vmatpush1.bf16.msra.mxu0 %v755
    %839 = vmatprep.subr.bf16.mxu0 0
    %840 = vmatpush1.bf16.msra.mxu0 %v754
    %841 = vmatprep.subr.bf16.mxu0 0
    %842 = vmatpush1.bf16.msra.mxu0 %v753
    %843 = vmatprep.subr.bf16.mxu0 0
    %844 = vmatpush1.bf16.msra.mxu0 %v752
    %845 = vmatprep.subr.bf16.mxu0 0
    %846 = vmatpush1.bf16.msra.mxu0 %v751
    %847 = vmatprep.subr.bf16.mxu0 0
    %848 = vmatpush1.bf16.msra.mxu0 %v750
    %849 = vmatprep.subr.bf16.mxu0 0
    %850 = vmatpush1.bf16.msra.mxu0 %v749
    %851 = vmatprep.subr.bf16.mxu0 0
    %852 = vmatpush1.bf16.msra.mxu0 %v748
    %853 = vmatprep.subr.bf16.mxu0 0
    %854 = vmatpush2.bf16.msra.mxu0 %v763
    %855 = vmatprep.subr.bf16.mxu0 0
    %856 = vmatpush2.bf16.msra.mxu0 %v762
    %857 = vmatprep.subr.bf16.mxu0 0
    %858 = vmatpush2.bf16.msra.mxu0 %v761
    %859 = vmatprep.subr.bf16.mxu0 0
    %860 = vmatpush2.bf16.msra.mxu0 %v760
    %861 = vmatprep.subr.bf16.mxu0 0
    %862 = vmatpush2.bf16.msra.mxu0 %v759
    %863 = vmatprep.subr.bf16.mxu0 0
    %864 = vmatpush2.bf16.msra.mxu0 %v758
    %865 = vmatprep.subr.bf16.mxu0 0
    %866 = vmatpush2.bf16.msra.mxu0 %v757
    %867 = vmatprep.subr.bf16.mxu0 0
    %868 = vmatpush2.bf16.msra.mxu0 %v756
    %869 = vmatprep.mubr.bf16.mxu0 %v532
    %870 = vmatmul.mubr.bf16.gmra.mxu0 %v531
    %v871 = vpop.f32.mrf.mxu0
    %v872 = vadd.f32 %v831, %v871
    %v873 = vpop.f32.mrf.mxu0
    %v874 = vpop.f32.mrf.mxu0
    %v875 = vadd.f32 %v834, %v874
    %v876 = vpop.f32.mrf.mxu0
    %877 = vdwg.mxu0
    %v878 = vstv %s82
    %v879 = vmul.f32 %v872, %v878
    %v880 = vmul.f32 %v875, %v878
    %881 = vst [vmem:[#allocation10] sm:$0xff] %v879
    %882 = vst [vmem:[#allocation10 + $0x8] sm:$0xff] %v880
    // Predicated region
    $region42: #{tpu_custom_call.1} parent=1 // pred_check
      _
    $region43: #{tpu_custom_call.1} parent=1 // pred_check_branch
      %884 = sbr.rel (0) target = $region45
    $region44: #{tpu_custom_call.1} parent=1 // pred_region
      %s886 = ssub.s32 256, 256
      %887 = vsyncadd [#allocation4], %s886
      %s888 = sshll.u32 [#allocation10], 4
      %s889 = int_to_ptr.vmem [resolvable:$true] %s888
      %894 = dma.vmem_to_hbm [thread:$0]  %s889, 256, %s6, [#allocation4], 128, 128, 8
    $region45: #{tpu_custom_call.1} parent=1 // pred_fallthru
      _
    // Predicated region
    $region46: #{tpu_custom_call.1} parent=1 // pred_check
      _
    $region47: #{tpu_custom_call.1} parent=1 // pred_check_branch
      %896 = sbr.rel (0) target = $region49
    $region48: #{tpu_custom_call.1} parent=1 // pred_region
      %897 = dma.done [#allocation4], 256
    $region49: #{tpu_custom_call.1} parent=1 // pred_fallthru
      _
    %898 = vsyncpa [#allocation3], 1
    %899 = vsyncpa [#allocation8], 1
    %900 = vsyncpa [#allocation4], 1
    %901 = vsyncpa [#allocation5], 1

// kernel: tpu_custom_call.1
$region0: #{tpu_custom_call.1}
  #allocation0 [shape = 'u32[]', space=smem, size = 0x4, offset = 0x4, fixed_abs, tag = 'smem constant byte address 0x4 - core index']
  #allocation1 [shape = 'u32[144,128]{1,0:T(1,128)}', space=vmem, size = 0x12000, scoped, tag = 'internal scratch']
  %s0 = inlined_call_operand.hbm [shape: f32[1,8], index: 0, kind: input, shape index: {}]
  %s1 = inlined_call_operand.hbm [shape: f32[16,128], index: 1, kind: input, shape index: {}]
  %s2 = inlined_call_operand.hbm [shape: bf16[128,512], index: 2, kind: input, shape index: {}]
  %s3 = inlined_call_operand.vmem [shape: f32[1,512], index: 3, kind: input, shape index: {}]
  %s4 = inlined_call_operand.hbm [shape: bf16[512,128], index: 4, kind: input, shape index: {}]
  %s5 = inlined_call_operand.vmem [shape: f32[1,128], index: 5, kind: input, shape index: {}]
  %s6 = inlined_call_operand.hbm [shape: f32[16,128], index: 6, kind: output, shape index: {}]
  %s7 = sld [smem:[#allocation0]]
  $region50: #{tpu_custom_call.1} parent=0
    _
  %s9 = ssub.s32 1, %s7
  %s10 = scalar_select 0, %s9, %s7
  $region1: #{tpu_custom_call.1} parent=0
    #allocation2 [shape = 'u8[512]{0}', space=smem, size = 0x200, scoped, tag = 'input window, operand 0, single buffered']
    #allocation3 [shape = 's32[1]{0}', space=sflag, size = 0x4, scoped, tag = 'scoped memory for tpu_custom_call.1']
    #allocation4 [shape = 's32[1]{0}', space=sflag, size = 0x4, scoped, tag = 'scoped memory for tpu_custom_call.1']
    #allocation5 [shape = 's32[1]{0}', space=sflag, size = 0x4, scoped, tag = 'scoped memory for tpu_custom_call.1']
    #allocation6 [shape = 'u8[8192]{0}', space=vmem, size = 0x2000, scoped, tag = 'input window, operand 1, single buffered']
    #allocation7 [shape = 'u8[131072]{0}', space=vmem, size = 0x20000, scoped, tag = 'input window, operand 2, single buffered']
    #allocation8 [shape = 's32[1]{0}', space=sflag, size = 0x4, scoped, tag = 'scoped memory for tpu_custom_call.1']
    #allocation9 [shape = 'u8[131072]{0}', space=vmem, size = 0x20000, scoped, tag = 'input window, operand 4, single buffered']
    #allocation10 [shape = 'u8[8192]{0}', space=vmem, size = 0x2000, scoped, tag = 'output window, operand 0, single buffered']
    %11 = vsyncpa [#allocation5], 0
    %12 = vsyncpa [#allocation3], 0
    %13 = vsyncpa [#allocation8], 0
    %14 = vsyncpa [#allocation4], 0
    // Predicated region
    $region2: #{tpu_custom_call.1} parent=1 // pred_check
      _
    $region3: #{tpu_custom_call.1} parent=1 // pred_check_branch
      %16 = sbr.rel (0) target = $region5
    $region4: #{tpu_custom_call.1} parent=1 // pred_region
      %s18 = ssub.s32 16, 16
      %19 = vsyncadd [#allocation5], %s18
      %22 = dma.hbm_to_smem %s0, 16, [#allocation2], [#allocation5]
    $region5: #{tpu_custom_call.1} parent=1 // pred_fallthru
      _
    // Predicated region
    $region6: #{tpu_custom_call.1} parent=1 // pred_check
      _
    $region7: #{tpu_custom_call.1} parent=1 // pred_check_branch
      %24 = sbr.rel (0) target = $region9
    $region8: #{tpu_custom_call.1} parent=1 // pred_region
      %s26 = ssub.s32 256, 256
      %27 = vsyncadd [#allocation3], %s26
      %s28 = sshll.u32 [#allocation6], 4
      %s29 = int_to_ptr.vmem [resolvable:$true] %s28
      %34 = dma.hbm_to_vmem [thread:$0]  %s1, 256, %s29, [#allocation3], 128, 128, 8
    $region9: #{tpu_custom_call.1} parent=1 // pred_fallthru
      _
    // Predicated region
    $region10: #{tpu_custom_call.1} parent=1 // pred_check
      _
    $region11: #{tpu_custom_call.1} parent=1 // pred_check_branch
      %36 = sbr.rel (0) target = $region13
    $region12: #{tpu_custom_call.1} parent=1 // pred_region
      %s38 = ssub.s32 4096, 4096
      %39 = vsyncadd [#allocation8], %s38
      %s40 = sshll.u32 [#allocation7], 4
      %s41 = int_to_ptr.vmem [resolvable:$true] %s40
      %46 = dma.hbm_to_vmem [thread:$0]  %s2, 4096, %s41, [#allocation8], 256, 256, 16
    $region13: #{tpu_custom_call.1} parent=1 // pred_fallthru
      _
    // Predicated region
    $region14: #{tpu_custom_call.1} parent=1 // pred_check
      _
    $region15: #{tpu_custom_call.1} parent=1 // pred_check_branch
      %48 = sbr.rel (0) target = $region17
    $region16: #{tpu_custom_call.1} parent=1 // pred_region
      _
    $region17: #{tpu_custom_call.1} parent=1 // pred_fallthru
      _
    // Predicated region
    $region18: #{tpu_custom_call.1} parent=1 // pred_check
      _
    $region19: #{tpu_custom_call.1} parent=1 // pred_check_branch
      %50 = sbr.rel (0) target = $region21
    $region20: #{tpu_custom_call.1} parent=1 // pred_region
      %s52 = ssub.s32 4096, 4096
      %53 = vsyncadd [#allocation8], %s52
      %s54 = sshll.u32 [#allocation9], 4
      %s55 = int_to_ptr.vmem [resolvable:$true] %s54
      %60 = dma.hbm_to_vmem [thread:$0]  %s4, 4096, %s55, [#allocation8], 64, 64, 4
    $region21: #{tpu_custom_call.1} parent=1 // pred_fallthru
      _
    // Predicated region
    $region22: #{tpu_custom_call.1} parent=1 // pred_check
      _
    $region23: #{tpu_custom_call.1} parent=1 // pred_check_branch
      %62 = sbr.rel (0) target = $region25
    $region24: #{tpu_custom_call.1} parent=1 // pred_region
      _
    $region25: #{tpu_custom_call.1} parent=1 // pred_fallthru
      _
    // Predicated region
    $region26: #{tpu_custom_call.1} parent=1 // pred_check
      _
    $region27: #{tpu_custom_call.1} parent=1 // pred_check_branch
      %64 = sbr.rel (0) target = $region29
    $region28: #{tpu_custom_call.1} parent=1 // pred_region
      %65 = dma.done [#allocation5], 16
    $region29: #{tpu_custom_call.1} parent=1 // pred_fallthru
      _
    // Predicated region
    $region30: #{tpu_custom_call.1} parent=1 // pred_check
      _
    $region31: #{tpu_custom_call.1} parent=1 // pred_check_branch
      %67 = sbr.rel (0) target = $region33
    $region32: #{tpu_custom_call.1} parent=1 // pred_region
      %68 = dma.done [#allocation3], 256
    $region33: #{tpu_custom_call.1} parent=1 // pred_fallthru
      _
    // Predicated region
    $region34: #{tpu_custom_call.1} parent=1 // pred_check
      _
    $region35: #{tpu_custom_call.1} parent=1 // pred_check_branch
      %70 = sbr.rel (0) target = $region37
    $region36: #{tpu_custom_call.1} parent=1 // pred_region
      %71 = dma.done [#allocation8], 4096
    $region37: #{tpu_custom_call.1} parent=1 // pred_fallthru
      _
    // Predicated region
    $region38: #{tpu_custom_call.1} parent=1 // pred_check
      _
    $region39: #{tpu_custom_call.1} parent=1 // pred_check_branch
      %73 = sbr.rel (0) target = $region41
    $region40: #{tpu_custom_call.1} parent=1 // pred_region
      %74 = dma.done [#allocation8], 4096
    $region41: #{tpu_custom_call.1} parent=1 // pred_fallthru
      _
    %75 = sfence
    %s77 = sld [smem:[#allocation2]]
    %s78 = sld [smem:[#allocation2 + $0x1]]
    %s79 = sld [smem:[#allocation2 + $0x2]]
    %s80 = sld [smem:[#allocation2 + $0x3]]
    %s81 = sld [smem:[#allocation2 + $0x4]]
    %s82 = sld [smem:[#allocation2 + $0x5]]
    %v83 = vld [vmem:[#allocation6] sm:$0xff]
    %v84 = vld [vmem:[#allocation6 + $0x8] sm:$0xff]
    %v85 = vld [vmem:[%s3] sm:$0xf]
    %v86 = vstv %s77
    %v87 = vmul.f32 %v83, %v86
    %v88 = vmul.f32 %v84, %v86
    %v89 = vround.ne.pseudo %v87
    %v90 = vround.ne.pseudo %v88
    %v91 = vmax.f32 %v89, -128.0
    %v92 = vmax.f32 %v90, -128.0
    %v93 = vmin.f32 %v91, 127.0
    %v94 = vmin.f32 %v92, 127.0
    %v95 = vpack.c.bf16 %v94, %v93
    %v96 = vld [vmem:[#allocation7] sm:$0xff]
    %v97 = vld [vmem:[#allocation7 + $0x8] sm:$0xff]
    %v98 = vld [vmem:[#allocation7 + $0x10] sm:$0xff]
    %v99 = vld [vmem:[#allocation7 + $0x18] sm:$0xff]
    %v100 = vld [vmem:[#allocation7 + $0x20] sm:$0xff]
    %v101 = vld [vmem:[#allocation7 + $0x28] sm:$0xff]
    %v102 = vld [vmem:[#allocation7 + $0x30] sm:$0xff]
    %v103 = vld [vmem:[#allocation7 + $0x38] sm:$0xff]
    %v104 = vld [vmem:[#allocation7 + $0x40] sm:$0xff]
    %v105 = vld [vmem:[#allocation7 + $0x48] sm:$0xff]
    %v106 = vld [vmem:[#allocation7 + $0x50] sm:$0xff]
    %v107 = vld [vmem:[#allocation7 + $0x58] sm:$0xff]
    %v108 = vld [vmem:[#allocation7 + $0x60] sm:$0xff]
    %v109 = vld [vmem:[#allocation7 + $0x68] sm:$0xff]
    %v110 = vld [vmem:[#allocation7 + $0x70] sm:$0xff]
    %v111 = vld [vmem:[#allocation7 + $0x78] sm:$0xff]
    %v112 = vld [vmem:[#allocation7 + $0x80] sm:$0xff]
    %v113 = vld [vmem:[#allocation7 + $0x88] sm:$0xff]
    %v114 = vld [vmem:[#allocation7 + $0x90] sm:$0xff]
    %v115 = vld [vmem:[#allocation7 + $0x98] sm:$0xff]
    %v116 = vld [vmem:[#allocation7 + $0xa0] sm:$0xff]
    %v117 = vld [vmem:[#allocation7 + $0xa8] sm:$0xff]
    %v118 = vld [vmem:[#allocation7 + $0xb0] sm:$0xff]
    %v119 = vld [vmem:[#allocation7 + $0xb8] sm:$0xff]
    %v120 = vld [vmem:[#allocation7 + $0xc0] sm:$0xff]
    %v121 = vld [vmem:[#allocation7 + $0xc8] sm:$0xff]
    %v122 = vld [vmem:[#allocation7 + $0xd0] sm:$0xff]
    %v123 = vld [vmem:[#allocation7 + $0xd8] sm:$0xff]
    %v124 = vld [vmem:[#allocation7 + $0xe0] sm:$0xff]
    %v125 = vld [vmem:[#allocation7 + $0xe8] sm:$0xff]
    %v126 = vld [vmem:[#allocation7 + $0xf0] sm:$0xff]
    %v127 = vld [vmem:[#allocation7 + $0xf8] sm:$0xff]
    %v129 = vlaneseq
    %v130 = vshrl.u32 %v129, 7
    %v131 = vsub.s32 0, %v130
    %v132 = vrot.slane %v85, %v131
    %v133 = vlaneseq
    %v134 = vshrl.u32 %v133, 7
    %v135 = vsub.s32 1, %v134
    %v136 = vrot.slane %v85, %v135
    %v137 = vlaneseq
    %v138 = vshrl.u32 %v137, 7
    %v139 = vsub.s32 2, %v138
    %v140 = vrot.slane %v85, %v139
    %v141 = vlaneseq
    %v142 = vshrl.u32 %v141, 7
    %v143 = vsub.s32 3, %v142
    %v144 = vrot.slane %v85, %v143
    %v181 = vunpack.c.l.b16 %v96
    %v182 = vunpack.c.h.b16 %v96
    %v183 = vunpack.c.l.b16 %v97
    %v184 = vunpack.c.h.b16 %v97
    %v185 = vunpack.c.l.b16 %v98
    %v186 = vunpack.c.h.b16 %v98
    %v187 = vunpack.c.l.b16 %v99
    %v188 = vunpack.c.h.b16 %v99
    %v189 = vunpack.c.l.b16 %v100
    %v190 = vunpack.c.h.b16 %v100
    %v191 = vunpack.c.l.b16 %v101
    %v192 = vunpack.c.h.b16 %v101
    %v193 = vunpack.c.l.b16 %v102
    %v194 = vunpack.c.h.b16 %v102
    %v195 = vunpack.c.l.b16 %v103
    %v196 = vunpack.c.h.b16 %v103
    %v197 = vunpack.c.l.b16 %v104
    %v198 = vunpack.c.h.b16 %v104
    %v199 = vunpack.c.l.b16 %v105
    %v200 = vunpack.c.h.b16 %v105
    %v201 = vunpack.c.l.b16 %v106
    %v202 = vunpack.c.h.b16 %v106
    %v203 = vunpack.c.l.b16 %v107
    %v204 = vunpack.c.h.b16 %v107
    %v205 = vunpack.c.l.b16 %v108
    %v206 = vunpack.c.h.b16 %v108
    %v207 = vunpack.c.l.b16 %v109
    %v208 = vunpack.c.h.b16 %v109
    %v209 = vunpack.c.l.b16 %v110
    %v210 = vunpack.c.h.b16 %v110
    %v211 = vunpack.c.l.b16 %v111
    %v212 = vunpack.c.h.b16 %v111
    %v213 = vunpack.c.l.b16 %v112
    %v214 = vunpack.c.h.b16 %v112
    %v215 = vunpack.c.l.b16 %v113
    %v216 = vunpack.c.h.b16 %v113
    %v217 = vunpack.c.l.b16 %v114
    %v218 = vunpack.c.h.b16 %v114
    %v219 = vunpack.c.l.b16 %v115
    %v220 = vunpack.c.h.b16 %v115
    %v221 = vunpack.c.l.b16 %v116
    %v222 = vunpack.c.h.b16 %v116
    %v223 = vunpack.c.l.b16 %v117
    %v224 = vunpack.c.h.b16 %v117
    %v225 = vunpack.c.l.b16 %v118
    %v226 = vunpack.c.h.b16 %v118
    %v227 = vunpack.c.l.b16 %v119
    %v228 = vunpack.c.h.b16 %v119
    %v229 = vunpack.c.l.b16 %v120
    %v230 = vunpack.c.h.b16 %v120
    %v231 = vunpack.c.l.b16 %v121
    %v232 = vunpack.c.h.b16 %v121
    %v233 = vunpack.c.l.b16 %v122
    %v234 = vunpack.c.h.b16 %v122
    %v235 = vunpack.c.l.b16 %v123
    %v236 = vunpack.c.h.b16 %v123
    %v237 = vunpack.c.l.b16 %v124
    %v238 = vunpack.c.h.b16 %v124
    %v239 = vunpack.c.l.b16 %v125
    %v240 = vunpack.c.h.b16 %v125
    %v241 = vunpack.c.l.b16 %v126
    %v242 = vunpack.c.h.b16 %v126
    %v243 = vunpack.c.l.b16 %v127
    %v244 = vunpack.c.h.b16 %v127
    %v245 = vpack.c.b16 %v185, %v181
    %v246 = vpack.c.b16 %v186, %v182
    %v247 = vpack.c.b16 %v187, %v183
    %v248 = vpack.c.b16 %v188, %v184
    %v249 = vpack.c.b16 %v193, %v189
    %v250 = vpack.c.b16 %v194, %v190
    %v251 = vpack.c.b16 %v195, %v191
    %v252 = vpack.c.b16 %v196, %v192
    %v253 = vpack.c.b16 %v201, %v197
    %v254 = vpack.c.b16 %v202, %v198
    %v255 = vpack.c.b16 %v203, %v199
    %v256 = vpack.c.b16 %v204, %v200
    %v257 = vpack.c.b16 %v209, %v205
    %v258 = vpack.c.b16 %v210, %v206
    %v259 = vpack.c.b16 %v211, %v207
    %v260 = vpack.c.b16 %v212, %v208
    %v261 = vpack.c.b16 %v217, %v213
    %v262 = vpack.c.b16 %v218, %v214
    %v263 = vpack.c.b16 %v219, %v215
    %v264 = vpack.c.b16 %v220, %v216
    %v265 = vpack.c.b16 %v225, %v221
    %v266 = vpack.c.b16 %v226, %v222
    %v267 = vpack.c.b16 %v227, %v223
    %v268 = vpack.c.b16 %v228, %v224
    %v269 = vpack.c.b16 %v233, %v229
    %v270 = vpack.c.b16 %v234, %v230
    %v271 = vpack.c.b16 %v235, %v231
    %v272 = vpack.c.b16 %v236, %v232
    %v273 = vpack.c.b16 %v241, %v237
    %v274 = vpack.c.b16 %v242, %v238
    %v275 = vpack.c.b16 %v243, %v239
    %v276 = vpack.c.b16 %v244, %v240
    %309 = vmatprep.subr.bf16.mxu0 %v274
    %310 = vmatpush1.bf16.msra.mxu0 %v273
    %311 = vmatprep.subr.bf16.mxu0 %v270
    %312 = vmatpush1.bf16.msra.mxu0 %v269
    %313 = vmatprep.subr.bf16.mxu0 %v266
    %314 = vmatpush1.bf16.msra.mxu0 %v265
    %315 = vmatprep.subr.bf16.mxu0 %v262
    %316 = vmatpush1.bf16.msra.mxu0 %v261
    %317 = vmatprep.subr.bf16.mxu0 %v258
    %318 = vmatpush1.bf16.msra.mxu0 %v257
    %319 = vmatprep.subr.bf16.mxu0 %v254
    %320 = vmatpush1.bf16.msra.mxu0 %v253
    %321 = vmatprep.subr.bf16.mxu0 %v250
    %322 = vmatpush1.bf16.msra.mxu0 %v249
    %323 = vmatprep.subr.bf16.mxu0 %v246
    %324 = vmatpush1.bf16.msra.mxu0 %v245
    %325 = vmatprep.subr.bf16.mxu0 0
    %326 = vmatpush2.bf16.msra.mxu0 0
    %327 = vmatprep.subr.bf16.mxu0 0
    %328 = vmatpush2.bf16.msra.mxu0 0
    %329 = vmatprep.subr.bf16.mxu0 0
    %330 = vmatpush2.bf16.msra.mxu0 0
    %331 = vmatprep.subr.bf16.mxu0 0
    %332 = vmatpush2.bf16.msra.mxu0 0
    %333 = vmatprep.subr.bf16.mxu0 0
    %334 = vmatpush2.bf16.msra.mxu0 0
    %335 = vmatprep.subr.bf16.mxu0 0
    %336 = vmatpush2.bf16.msra.mxu0 0
    %337 = vmatprep.subr.bf16.mxu0 0
    %338 = vmatpush2.bf16.msra.mxu0 0
    %339 = vmatprep.subr.bf16.mxu0 0
    %340 = vmatpush2.bf16.msra.mxu0 0
    %341 = vmatprep.mubr.bf16.mxu0 0
    %342 = vmatmul.mubr.bf16.gmra.mxu0 %v95
    %v343 = vpop.f32.mrf.mxu0
    %v344 = vadd.f32 %v132, %v343
    %v345 = vpop.f32.mrf.mxu0
    %v346 = vadd.f32 %v136, %v345
    %v347 = vpop.f32.mrf.mxu0
    %v348 = vadd.f32 %v132, %v347
    %v349 = vpop.f32.mrf.mxu0
    %v350 = vadd.f32 %v136, %v349
    %351 = vdwg.mxu0
    %352 = vmatprep.subr.bf16.mxu0 %v276
    %353 = vmatpush1.bf16.msra.mxu0 %v275
    %354 = vmatprep.subr.bf16.mxu0 %v272
    %355 = vmatpush1.bf16.msra.mxu0 %v271
    %356 = vmatprep.subr.bf16.mxu0 %v268
    %357 = vmatpush1.bf16.msra.mxu0 %v267
    %358 = vmatprep.subr.bf16.mxu0 %v264
    %359 = vmatpush1.bf16.msra.mxu0 %v263
    %360 = vmatprep.subr.bf16.mxu0 %v260
    %361 = vmatpush1.bf16.msra.mxu0 %v259
    %362 = vmatprep.subr.bf16.mxu0 %v256
    %363 = vmatpush1.bf16.msra.mxu0 %v255
    %364 = vmatprep.subr.bf16.mxu0 %v252
    %365 = vmatpush1.bf16.msra.mxu0 %v251
    %366 = vmatprep.subr.bf16.mxu0 %v248
    %367 = vmatpush1.bf16.msra.mxu0 %v247
    %368 = vmatprep.subr.bf16.mxu0 0
    %369 = vmatpush2.bf16.msra.mxu0 0
    %370 = vmatprep.subr.bf16.mxu0 0
    %371 = vmatpush2.bf16.msra.mxu0 0
    %372 = vmatprep.subr.bf16.mxu0 0
    %373 = vmatpush2.bf16.msra.mxu0 0
    %374 = vmatprep.subr.bf16.mxu0 0
    %375 = vmatpush2.bf16.msra.mxu0 0
    %376 = vmatprep.subr.bf16.mxu0 0
    %377 = vmatpush2.bf16.msra.mxu0 0
    %378 = vmatprep.subr.bf16.mxu0 0
    %379 = vmatpush2.bf16.msra.mxu0 0
    %380 = vmatprep.subr.bf16.mxu0 0
    %381 = vmatpush2.bf16.msra.mxu0 0
    %382 = vmatprep.subr.bf16.mxu0 0
    %383 = vmatpush2.bf16.msra.mxu0 0
    %384 = vmatprep.mubr.bf16.mxu0 0
    %385 = vmatmul.mubr.bf16.gmra.mxu0 %v95
    %v386 = vpop.f32.mrf.mxu0
    %v387 = vadd.f32 %v140, %v386
    %v388 = vpop.f32.mrf.mxu0
    %v389 = vadd.f32 %v144, %v388
    %v390 = vpop.f32.mrf.mxu0
    %v391 = vadd.f32 %v140, %v390
    %v392 = vpop.f32.mrf.mxu0
    %v393 = vadd.f32 %v144, %v392
    %394 = vdwg.mxu0
    %v395 = vand.u32 2147483647, %v344
    %v396 = vand.u32 2147483647, %v346
    %v397 = vand.u32 2147483647, %v387
    %v398 = vand.u32 2147483647, %v389
    %v399 = vand.u32 2147483647, %v348
    %v400 = vand.u32 2147483647, %v350
    %v401 = vand.u32 2147483647, %v391
    %v402 = vand.u32 2147483647, %v393
    %s403 = ssub.f32 0.0, %s78
    %v404 = vstv %s403
    %v405 = vmin.f32 %v395, %v404
    %v406 = vmin.f32 %v396, %v404
    %v407 = vmin.f32 %v397, %v404
    %v408 = vmin.f32 %v398, %v404
    %v409 = vmin.f32 %v399, %v404
    %v410 = vmin.f32 %v400, %v404
    %v411 = vmin.f32 %v401, %v404
    %v412 = vmin.f32 %v402, %v404
    %v413 = vstv %s78
    %v414 = vadd.f32 %v405, %v413
    %v415 = vadd.f32 %v406, %v413
    %v416 = vadd.f32 %v407, %v413
    %v417 = vadd.f32 %v408, %v413
    %v418 = vadd.f32 %v409, %v413
    %v419 = vadd.f32 %v410, %v413
    %v420 = vadd.f32 %v411, %v413
    %v421 = vadd.f32 %v412, %v413
    %v422 = vmul.f32 %v414, %v414
    %v423 = vmul.f32 %v415, %v415
    %v424 = vmul.f32 %v416, %v416
    %v425 = vmul.f32 %v417, %v417
    %v426 = vmul.f32 %v418, %v418
    %v427 = vmul.f32 %v419, %v419
    %v428 = vmul.f32 %v420, %v420
    %v429 = vmul.f32 %v421, %v421
    %v430 = vstv %s79
    %v431 = vadd.f32 %v422, %v430
    %v432 = vadd.f32 %v423, %v430
    %v433 = vadd.f32 %v424, %v430
    %v434 = vadd.f32 %v425, %v430
    %v435 = vadd.f32 %v426, %v430
    %v436 = vadd.f32 %v427, %v430
    %v437 = vadd.f32 %v428, %v430
    %v438 = vadd.f32 %v429, %v430
    %vm439 = vcmp.lt.f32.partialorder %v344, 0.0
    %vm440 = vcmp.lt.f32.partialorder %v346, 0.0
    %vm441 = vcmp.lt.f32.partialorder %v387, 0.0
    %vm442 = vcmp.lt.f32.partialorder %v389, 0.0
    %vm443 = vcmp.lt.f32.partialorder %v348, 0.0
    %vm444 = vcmp.lt.f32.partialorder %v350, 0.0
    %vm445 = vcmp.lt.f32.partialorder %v391, 0.0
    %vm446 = vcmp.lt.f32.partialorder %v393, 0.0
    %v447 = vsub.f32 0.0, %v431
    %v448 = vsub.f32 0.0, %v432
    %v449 = vsub.f32 0.0, %v433
    %v450 = vsub.f32 0.0, %v434
    %v451 = vsub.f32 0.0, %v435
    %v452 = vsub.f32 0.0, %v436
    %v453 = vsub.f32 0.0, %v437
    %v454 = vsub.f32 0.0, %v438
    %v455 = vsel %vm439, %v447, %v431
    %v456 = vsel %vm440, %v448, %v432
    %v457 = vsel %vm441, %v449, %v433
    %v458 = vsel %vm442, %v450, %v434
    %v459 = vsel %vm443, %v451, %v435
    %v460 = vsel %vm444, %v452, %v436
    %v461 = vsel %vm445, %v453, %v437
    %v462 = vsel %vm446, %v454, %v438
    %v463 = vmul.f32 %v455, 6.1035156e-05
    %v464 = vmul.f32 %v456, 6.1035156e-05
    %v465 = vmul.f32 %v457, 6.1035156e-05
    %v466 = vmul.f32 %v458, 6.1035156e-05
    %v467 = vmul.f32 %v459, 6.1035156e-05
    %v468 = vmul.f32 %v460, 6.1035156e-05
    %v469 = vmul.f32 %v461, 6.1035156e-05
    %v470 = vmul.f32 %v462, 6.1035156e-05
    %v471 = vfloor.f32 %v463
    %v472 = vfloor.f32 %v464
    %v473 = vfloor.f32 %v465
    %v474 = vfloor.f32 %v466
    %v475 = vfloor.f32 %v467
    %v476 = vfloor.f32 %v468
    %v477 = vfloor.f32 %v469
    %v478 = vfloor.f32 %v470
    %v479 = vstv %s80
    %v480 = vadd.f32 %v471, %v479
    %v481 = vadd.f32 %v472, %v479
    %v482 = vadd.f32 %v473, %v479
    %v483 = vadd.f32 %v474, %v479
    %v484 = vadd.f32 %v475, %v479
    %v485 = vadd.f32 %v476, %v479
    %v486 = vadd.f32 %v477, %v479
    %v487 = vadd.f32 %v478, %v479
    %v488 = vmul.f32 %v344, %v480
    %v489 = vmul.f32 %v346, %v481
    %v490 = vmul.f32 %v387, %v482
    %v491 = vmul.f32 %v389, %v483
    %v492 = vmul.f32 %v348, %v484
    %v493 = vmul.f32 %v350, %v485
    %v494 = vmul.f32 %v391, %v486
    %v495 = vmul.f32 %v393, %v487
    %v496 = vstv %s81
    %v497 = vmul.f32 %v488, %v496
    %v498 = vmul.f32 %v489, %v496
    %v499 = vmul.f32 %v490, %v496
    %v500 = vmul.f32 %v491, %v496
    %v501 = vmul.f32 %v492, %v496
    %v502 = vmul.f32 %v493, %v496
    %v503 = vmul.f32 %v494, %v496
    %v504 = vmul.f32 %v495, %v496
    %v505 = vround.ne.pseudo %v497
    %v506 = vround.ne.pseudo %v498
    %v507 = vround.ne.pseudo %v499
    %v508 = vround.ne.pseudo %v500
    %v509 = vround.ne.pseudo %v501
    %v510 = vround.ne.pseudo %v502
    %v511 = vround.ne.pseudo %v503
    %v512 = vround.ne.pseudo %v504
    %v513 = vmax.f32 %v505, -128.0
    %v514 = vmax.f32 %v506, -128.0
    %v515 = vmax.f32 %v507, -128.0
    %v516 = vmax.f32 %v508, -128.0
    %v517 = vmax.f32 %v509, -128.0
    %v518 = vmax.f32 %v510, -128.0
    %v519 = vmax.f32 %v511, -128.0
    %v520 = vmax.f32 %v512, -128.0
    %v521 = vmin.f32 %v513, 127.0
    %v522 = vmin.f32 %v514, 127.0
    %v523 = vmin.f32 %v515, 127.0
    %v524 = vmin.f32 %v516, 127.0
    %v525 = vmin.f32 %v517, 127.0
    %v526 = vmin.f32 %v518, 127.0
    %v527 = vmin.f32 %v519, 127.0
    %v528 = vmin.f32 %v520, 127.0
    %v529 = vpack.c.bf16 %v525, %v521
    %v530 = vpack.c.bf16 %v526, %v522
    %v531 = vpack.c.bf16 %v527, %v523
    %v532 = vpack.c.bf16 %v528, %v524
    %v533 = vld [vmem:[#allocation9] sm:$0xf]
    %v534 = vld [vmem:[#allocation9 + $0x4] sm:$0xf]
    %v535 = vld [vmem:[#allocation9 + $0x8] sm:$0xf]
    %v536 = vld [vmem:[#allocation9 + $0xc] sm:$0xf]
    %v537 = vld [vmem:[#allocation9 + $0x10] sm:$0xf]
    %v538 = vld [vmem:[#allocation9 + $0x14] sm:$0xf]
    %v539 = vld [vmem:[#allocation9 + $0x18] sm:$0xf]
    %v540 = vld [vmem:[#allocation9 + $0x1c] sm:$0xf]
    %v541 = vld [vmem:[#allocation9 + $0x20] sm:$0xf]
    %v542 = vld [vmem:[#allocation9 + $0x24] sm:$0xf]
    %v543 = vld [vmem:[#allocation9 + $0x28] sm:$0xf]
    %v544 = vld [vmem:[#allocation9 + $0x2c] sm:$0xf]
    %v545 = vld [vmem:[#allocation9 + $0x30] sm:$0xf]
    %v546 = vld [vmem:[#allocation9 + $0x34] sm:$0xf]
    %v547 = vld [vmem:[#allocation9 + $0x38] sm:$0xf]
    %v548 = vld [vmem:[#allocation9 + $0x3c] sm:$0xf]
    %v549 = vld [vmem:[#allocation9 + $0x40] sm:$0xf]
    %v550 = vld [vmem:[#allocation9 + $0x44] sm:$0xf]
    %v551 = vld [vmem:[#allocation9 + $0x48] sm:$0xf]
    %v552 = vld [vmem:[#allocation9 + $0x4c] sm:$0xf]
    %v553 = vld [vmem:[#allocation9 + $0x50] sm:$0xf]
    %v554 = vld [vmem:[#allocation9 + $0x54] sm:$0xf]
    %v555 = vld [vmem:[#allocation9 + $0x58] sm:$0xf]
    %v556 = vld [vmem:[#allocation9 + $0x5c] sm:$0xf]
    %v557 = vld [vmem:[#allocation9 + $0x60] sm:$0xf]
    %v558 = vld [vmem:[#allocation9 + $0x64] sm:$0xf]
    %v559 = vld [vmem:[#allocation9 + $0x68] sm:$0xf]
    %v560 = vld [vmem:[#allocation9 + $0x6c] sm:$0xf]
    %v561 = vld [vmem:[#allocation9 + $0x70] sm:$0xf]
    %v562 = vld [vmem:[#allocation9 + $0x74] sm:$0xf]
    %v563 = vld [vmem:[#allocation9 + $0x78] sm:$0xf]
    %v564 = vld [vmem:[#allocation9 + $0x7c] sm:$0xf]
    %v565 = vld [vmem:[#allocation9 + $0x80] sm:$0xf]
    %v566 = vld [vmem:[#allocation9 + $0x84] sm:$0xf]
    %v567 = vld [vmem:[#allocation9 + $0x88] sm:$0xf]
    %v568 = vld [vmem:[#allocation9 + $0x8c] sm:$0xf]
    %v569 = vld [vmem:[#allocation9 + $0x90] sm:$0xf]
    %v570 = vld [vmem:[#allocation9 + $0x94] sm:$0xf]
    %v571 = vld [vmem:[#allocation9 + $0x98] sm:$0xf]
    %v572 = vld [vmem:[#allocation9 + $0x9c] sm:$0xf]
    %v573 = vld [vmem:[#allocation9 + $0xa0] sm:$0xf]
    %v574 = vld [vmem:[#allocation9 + $0xa4] sm:$0xf]
    %v575 = vld [vmem:[#allocation9 + $0xa8] sm:$0xf]
    %v576 = vld [vmem:[#allocation9 + $0xac] sm:$0xf]
    %v577 = vld [vmem:[#allocation9 + $0xb0] sm:$0xf]
    %v578 = vld [vmem:[#allocation9 + $0xb4] sm:$0xf]
    %v579 = vld [vmem:[#allocation9 + $0xb8] sm:$0xf]
    %v580 = vld [vmem:[#allocation9 + $0xbc] sm:$0xf]
    %v581 = vld [vmem:[#allocation9 + $0xc0] sm:$0xf]
    %v582 = vld [vmem:[#allocation9 + $0xc4] sm:$0xf]
    %v583 = vld [vmem:[#allocation9 + $0xc8] sm:$0xf]
    %v584 = vld [vmem:[#allocation9 + $0xcc] sm:$0xf]
    %v585 = vld [vmem:[#allocation9 + $0xd0] sm:$0xf]
    %v586 = vld [vmem:[#allocation9 + $0xd4] sm:$0xf]
    %v587 = vld [vmem:[#allocation9 + $0xd8] sm:$0xf]
    %v588 = vld [vmem:[#allocation9 + $0xdc] sm:$0xf]
    %v589 = vld [vmem:[#allocation9 + $0xe0] sm:$0xf]
    %v590 = vld [vmem:[#allocation9 + $0xe4] sm:$0xf]
    %v591 = vld [vmem:[#allocation9 + $0xe8] sm:$0xf]
    %v592 = vld [vmem:[#allocation9 + $0xec] sm:$0xf]
    %v593 = vld [vmem:[#allocation9 + $0xf0] sm:$0xf]
    %v594 = vld [vmem:[#allocation9 + $0xf4] sm:$0xf]
    %v595 = vld [vmem:[#allocation9 + $0xf8] sm:$0xf]
    %v596 = vld [vmem:[#allocation9 + $0xfc] sm:$0xf]
    %v597 = vld [vmem:[%s5] sm:$0x1]
    %v599 = vlaneseq
    %v600 = vshrl.u32 %v599, 7
    %v601 = vsub.s32 0, %v600
    %v602 = vrot.slane %v597, %v601
    %v668 = vunpack.c.l.b16 %v533
    %v669 = vunpack.c.l.b16 %v534
    %v670 = vunpack.c.l.b16 %v535
    %v671 = vunpack.c.l.b16 %v536
    %v672 = vunpack.c.l.b16 %v537
    %v673 = vunpack.c.l.b16 %v538
    %v674 = vunpack.c.l.b16 %v539
    %v675 = vunpack.c.l.b16 %v540
    %v676 = vunpack.c.l.b16 %v541
    %v677 = vunpack.c.l.b16 %v542
    %v678 = vunpack.c.l.b16 %v543
    %v679 = vunpack.c.l.b16 %v544
    %v680 = vunpack.c.l.b16 %v545
    %v681 = vunpack.c.l.b16 %v546
    %v682 = vunpack.c.l.b16 %v547
    %v683 = vunpack.c.l.b16 %v548
    %v684 = vunpack.c.l.b16 %v549
    %v685 = vunpack.c.l.b16 %v550
    %v686 = vunpack.c.l.b16 %v551
    %v687 = vunpack.c.l.b16 %v552
    %v688 = vunpack.c.l.b16 %v553
    %v689 = vunpack.c.l.b16 %v554
    %v690 = vunpack.c.l.b16 %v555
    %v691 = vunpack.c.l.b16 %v556
    %v692 = vunpack.c.l.b16 %v557
    %v693 = vunpack.c.l.b16 %v558
    %v694 = vunpack.c.l.b16 %v559
    %v695 = vunpack.c.l.b16 %v560
    %v696 = vunpack.c.l.b16 %v561
    %v697 = vunpack.c.l.b16 %v562
    %v698 = vunpack.c.l.b16 %v563
    %v699 = vunpack.c.l.b16 %v564
    %v700 = vunpack.c.l.b16 %v565
    %v701 = vunpack.c.l.b16 %v566
    %v702 = vunpack.c.l.b16 %v567
    %v703 = vunpack.c.l.b16 %v568
    %v704 = vunpack.c.l.b16 %v569
    %v705 = vunpack.c.l.b16 %v570
    %v706 = vunpack.c.l.b16 %v571
    %v707 = vunpack.c.l.b16 %v572
    %v708 = vunpack.c.l.b16 %v573
    %v709 = vunpack.c.l.b16 %v574
    %v710 = vunpack.c.l.b16 %v575
    %v711 = vunpack.c.l.b16 %v576
    %v712 = vunpack.c.l.b16 %v577
    %v713 = vunpack.c.l.b16 %v578
    %v714 = vunpack.c.l.b16 %v579
    %v715 = vunpack.c.l.b16 %v580
    %v716 = vunpack.c.l.b16 %v581
    %v717 = vunpack.c.l.b16 %v582
    %v718 = vunpack.c.l.b16 %v583
    %v719 = vunpack.c.l.b16 %v584
    %v720 = vunpack.c.l.b16 %v585
    %v721 = vunpack.c.l.b16 %v586
    %v722 = vunpack.c.l.b16 %v587
    %v723 = vunpack.c.l.b16 %v588
    %v724 = vunpack.c.l.b16 %v589
    %v725 = vunpack.c.l.b16 %v590
    %v726 = vunpack.c.l.b16 %v591
    %v727 = vunpack.c.l.b16 %v592
    %v728 = vunpack.c.l.b16 %v593
    %v729 = vunpack.c.l.b16 %v594
    %v730 = vunpack.c.l.b16 %v595
    %v731 = vunpack.c.l.b16 %v596
    %v732 = vpack.c.b16 %v669, %v668
    %v733 = vpack.c.b16 %v671, %v670
    %v734 = vpack.c.b16 %v673, %v672
    %v735 = vpack.c.b16 %v675, %v674
    %v736 = vpack.c.b16 %v677, %v676
    %v737 = vpack.c.b16 %v679, %v678
    %v738 = vpack.c.b16 %v681, %v680
    %v739 = vpack.c.b16 %v683, %v682
    %v740 = vpack.c.b16 %v685, %v684
    %v741 = vpack.c.b16 %v687, %v686
    %v742 = vpack.c.b16 %v689, %v688
    %v743 = vpack.c.b16 %v691, %v690
    %v744 = vpack.c.b16 %v693, %v692
    %v745 = vpack.c.b16 %v695, %v694
    %v746 = vpack.c.b16 %v697, %v696
    %v747 = vpack.c.b16 %v699, %v698
    %v748 = vpack.c.b16 %v701, %v700
    %v749 = vpack.c.b16 %v703, %v702
    %v750 = vpack.c.b16 %v705, %v704
    %v751 = vpack.c.b16 %v707, %v706
    %v752 = vpack.c.b16 %v709, %v708
    %v753 = vpack.c.b16 %v711, %v710
    %v754 = vpack.c.b16 %v713, %v712
    %v755 = vpack.c.b16 %v715, %v714
    %v756 = vpack.c.b16 %v717, %v716
    %v757 = vpack.c.b16 %v719, %v718
    %v758 = vpack.c.b16 %v721, %v720
    %v759 = vpack.c.b16 %v723, %v722
    %v760 = vpack.c.b16 %v725, %v724
    %v761 = vpack.c.b16 %v727, %v726
    %v762 = vpack.c.b16 %v729, %v728
    %v763 = vpack.c.b16 %v731, %v730
    %796 = vmatprep.subr.bf16.mxu0 0
    %797 = vmatpush1.bf16.msra.mxu0 %v739
    %798 = vmatprep.subr.bf16.mxu0 0
    %799 = vmatpush1.bf16.msra.mxu0 %v738
    %800 = vmatprep.subr.bf16.mxu0 0
    %801 = vmatpush1.bf16.msra.mxu0 %v737
    %802 = vmatprep.subr.bf16.mxu0 0
    %803 = vmatpush1.bf16.msra.mxu0 %v736
    %804 = vmatprep.subr.bf16.mxu0 0
    %805 = vmatpush1.bf16.msra.mxu0 %v735
    %806 = vmatprep.subr.bf16.mxu0 0
    %807 = vmatpush1.bf16.msra.mxu0 %v734
    %808 = vmatprep.subr.bf16.mxu0 0
    %809 = vmatpush1.bf16.msra.mxu0 %v733
    %810 = vmatprep.subr.bf16.mxu0 0
    %811 = vmatpush1.bf16.msra.mxu0 %v732
    %812 = vmatprep.subr.bf16.mxu0 0
    %813 = vmatpush2.bf16.msra.mxu0 %v747
    %814 = vmatprep.subr.bf16.mxu0 0
    %815 = vmatpush2.bf16.msra.mxu0 %v746
    %816 = vmatprep.subr.bf16.mxu0 0
    %817 = vmatpush2.bf16.msra.mxu0 %v745
    %818 = vmatprep.subr.bf16.mxu0 0
    %819 = vmatpush2.bf16.msra.mxu0 %v744
    %820 = vmatprep.subr.bf16.mxu0 0
    %821 = vmatpush2.bf16.msra.mxu0 %v743
    %822 = vmatprep.subr.bf16.mxu0 0
    %823 = vmatpush2.bf16.msra.mxu0 %v742
    %824 = vmatprep.subr.bf16.mxu0 0
    %825 = vmatpush2.bf16.msra.mxu0 %v741
    %826 = vmatprep.subr.bf16.mxu0 0
    %827 = vmatpush2.bf16.msra.mxu0 %v740
    %828 = vmatprep.mubr.bf16.mxu0 %v530
    %829 = vmatmul.mubr.bf16.gmra.mxu0 %v529
    %v830 = vpop.f32.mrf.mxu0
    %v831 = vadd.f32 %v602, %v830
    %v832 = vpop.f32.mrf.mxu0
    %v833 = vpop.f32.mrf.mxu0
    %v834 = vadd.f32 %v602, %v833
    %v835 = vpop.f32.mrf.mxu0
    %836 = vdwg.mxu0
    %837 = vmatprep.subr.bf16.mxu0 0
    %838 = vmatpush1.bf16.msra.mxu0 %v755
    %839 = vmatprep.subr.bf16.mxu0 0
    %840 = vmatpush1.bf16.msra.mxu0 %v754
    %841 = vmatprep.subr.bf16.mxu0 0
    %842 = vmatpush1.bf16.msra.mxu0 %v753
    %843 = vmatprep.subr.bf16.mxu0 0
    %844 = vmatpush1.bf16.msra.mxu0 %v752
    %845 = vmatprep.subr.bf16.mxu0 0
    %846 = vmatpush1.bf16.msra.mxu0 %v751
    %847 = vmatprep.subr.bf16.mxu0 0
    %848 = vmatpush1.bf16.msra.mxu0 %v750
    %849 = vmatprep.subr.bf16.mxu0 0
    %850 = vmatpush1.bf16.msra.mxu0 %v749
    %851 = vmatprep.subr.bf16.mxu0 0
    %852 = vmatpush1.bf16.msra.mxu0 %v748
    %853 = vmatprep.subr.bf16.mxu0 0
    %854 = vmatpush2.bf16.msra.mxu0 %v763
    %855 = vmatprep.subr.bf16.mxu0 0
    %856 = vmatpush2.bf16.msra.mxu0 %v762
    %857 = vmatprep.subr.bf16.mxu0 0
    %858 = vmatpush2.bf16.msra.mxu0 %v761
    %859 = vmatprep.subr.bf16.mxu0 0
    %860 = vmatpush2.bf16.msra.mxu0 %v760
    %861 = vmatprep.subr.bf16.mxu0 0
    %862 = vmatpush2.bf16.msra.mxu0 %v759
    %863 = vmatprep.subr.bf16.mxu0 0
    %864 = vmatpush2.bf16.msra.mxu0 %v758
    %865 = vmatprep.subr.bf16.mxu0 0
    %866 = vmatpush2.bf16.msra.mxu0 %v757
    %867 = vmatprep.subr.bf16.mxu0 0
    %868 = vmatpush2.bf16.msra.mxu0 %v756
    %869 = vmatprep.mubr.bf16.mxu0 %v532
    %870 = vmatmul.mubr.bf16.gmra.mxu0 %v531
    %v871 = vpop.f32.mrf.mxu0
    %v872 = vadd.f32 %v831, %v871
    %v873 = vpop.f32.mrf.mxu0
    %v874 = vpop.f32.mrf.mxu0
    %v875 = vadd.f32 %v834, %v874
    %v876 = vpop.f32.mrf.mxu0
    %877 = vdwg.mxu0
    %v878 = vstv %s82
    %v879 = vmul.f32 %v872, %v878
    %v880 = vmul.f32 %v875, %v878
    %881 = vst [vmem:[#allocation10] sm:$0xff] %v879
    %882 = vst [vmem:[#allocation10 + $0x8] sm:$0xff] %v880
    // Predicated region
    $region42: #{tpu_custom_call.1} parent=1 // pred_check
      _
    $region43: #{tpu_custom_call.1} parent=1 // pred_check_branch
      %884 = sbr.rel (0) target = $region45
    $region44: #{tpu_custom_call.1} parent=1 // pred_region
      %s886 = ssub.s32 256, 256
      %887 = vsyncadd [#allocation4], %s886
      %s888 = sshll.u32 [#allocation10], 4
      %s889 = int_to_ptr.vmem [resolvable:$true] %s888
      %894 = dma.vmem_to_hbm [thread:$0]  %s889, 256, %s6, [#allocation4], 128, 128, 8
    $region45: #{tpu_custom_call.1} parent=1 // pred_fallthru
      _
    // Predicated region
    $region46: #{tpu_custom_call.1} parent=1 // pred_check
      _
    $region47: #{tpu_custom_call.1} parent=1 // pred_check_branch
      %896 = sbr.rel (0) target = $region49
    $region48: #{tpu_custom_call.1} parent=1 // pred_region
      %897 = dma.done [#allocation4], 256
    $region49: #{tpu_custom_call.1} parent=1 // pred_fallthru
      _
    %898 = vsyncpa [#allocation3], 1
    %899 = vsyncpa [#allocation8], 1
    %900 = vsyncpa [#allocation4], 1
    %901 = vsyncpa [#allocation5], 1

</llo_original>
